<compile_context>
chip_gen: v5e
topology: v5e:2x2
jax: 0.10.0
libtpu: 0.0.40
codegen_flags: <defaults>
</compile_context>

<pallas_src>
import functools
import math

import jax
import jax.numpy as jnp
from jax.experimental import pallas as pl
from jax.experimental.pallas import tpu as pltpu

EPS = 0.003
HIDDEN = 500        # logical hidden width (matches the PyTorch module)
HIDDEN_PAD = 512    # padded to a multiple of 128 lanes
SUBLANE = 8

_VMEM = pl.BlockSpec(memory_space=pltpu.MemorySpace.VMEM)
_SMEM = pl.BlockSpec(memory_space=pltpu.MemorySpace.SMEM)


def _actor_kernel(sigma_ref, state_ref,
                  w1_ref, b1_ref, e1_ref, eb1_ref,
                  w2_ref, b2_ref, e2_ref, eb2_ref,
                  w3t_ref, b3_ref, e3t_ref, eb3_ref,
                  out_ref, *, action_limit_v, action_limit_w):
    f32 = jnp.float32
    bf16 = jnp.bfloat16

    def noisy_layer(x, w_ref, b_ref, e_ref, eb_ref, sw, sb, relu):
        # W_eff = W + sigma * eps  (combine in f32, feed the MXU bf16, f32 acc)
        w_eff = (w_ref[...].astype(f32) + sw * e_ref[...].astype(f32)).astype(bf16)
        b_eff = b_ref[...] + sb * eb_ref[...]
        y = jnp.dot(x.astype(bf16), w_eff, preferred_element_type=f32) + b_eff
        return jnp.maximum(y, 0.0) if relu else y

    sw1, sb1 = sigma_ref[0], sigma_ref[1]
    sw2, sb2 = sigma_ref[2], sigma_ref[3]
    sw3, sb3 = sigma_ref[4], sigma_ref[5]

    h = noisy_layer(state_ref[...], w1_ref, b1_ref, e1_ref, eb1_ref, sw1, sb1, True)
    h = noisy_layer(h, w2_ref, b2_ref, e2_ref, eb2_ref, sw2, sb2, True)

    # Layer 3: weight / noise stored transposed (action_dim, HIDDEN_PAD) so the
    # HBM/VMEM tiles are lane-dense.  Contract over the last dim of both.
    w3_eff = (w3t_ref[...].astype(f32) + sw3 * e3t_ref[...].astype(f32)).astype(bf16)
    b3_eff = b3_ref[...] + sb3 * eb3_ref[...]
    a = jax.lax.dot_general(h.astype(bf16), w3_eff,
                            dimension_numbers=(((1,), (1,)), ((), ())),
                            preferred_element_type=f32) + b3_eff

    # action[:, 0] = sigmoid(.) * v_lim ; action[:, 1] = tanh(.) * w_lim ;
    # remaining columns (if any) pass through.  Single full-tile store.
    col = jax.lax.broadcasted_iota(jnp.int32, a.shape, 1)
    a_v = jax.nn.sigmoid(a) * action_limit_v
    a_w = jnp.tanh(a) * action_limit_w
    out_ref[...] = jnp.where(col == 0, a_v,
                             jnp.where(col == 1, a_w, a)).astype(out_ref.dtype)


def actor_forward(state, packed, noise, sigmas, *, action_limit_v, action_limit_w):
    """Actor.forward.  Handles both the 1-D single-state and 2-D batched
    branches of the PyTorch module (identical math for a single row)."""
    squeeze = state.ndim == 1
    if squeeze:
        state = state[None, :]
    B = state.shape[0]
    action_dim = packed["b3"].shape[1]
    b_pad = max(SUBLANE, -(-B // SUBLANE) * SUBLANE)          # pad batch to 8 sublanes
    state_p = jnp.pad(state.astype(jnp.float32), ((0, b_pad - B), (0, 0)))

    kernel = functools.partial(_actor_kernel,
                               action_limit_v=float(action_limit_v),
                               action_limit_w=float(action_limit_w))

    inputs = (
        sigmas, state_p,
        packed["w1"], packed["b1"], noise["e1"], noise["eb1"],
        packed["w2"], packed["b2"], noise["e2"], noise["eb2"],
        packed["w3t"], packed["b3"], noise["e3t"], noise["eb3"],
    )

    out = pl.pallas_call(
        kernel,
        out_shape=jax.ShapeDtypeStruct((b_pad, action_dim), jnp.float32),
        in_specs=[_SMEM] + [_VMEM] * (len(inputs) - 1),
        out_specs=_VMEM,
    )(*inputs)
    out = out[:B]
    return out[0] if squeeze else out


def init_actor_params(key, state_dim, action_dim):
    """Mirrors the PyTorch Actor.__init__; layers 1/2 stored (in, out),
    layer 3 stored transposed (out, in) = (action_dim, HIDDEN)."""
    ks = jax.random.split(key, 6)

    v1 = 1.0 / math.sqrt(HIDDEN)                       # fanin_init, fanin = 500
    w1 = jax.random.uniform(ks[0], (state_dim, HIDDEN), jnp.float32, -v1, v1)
    std1 = math.sqrt(3.0 / state_dim)
    b1 = jax.random.uniform(ks[1], (1, HIDDEN), jnp.float32, -std1, std1)

    v2 = 1.0 / math.sqrt(HIDDEN)
    w2 = jax.random.uniform(ks[2], (HIDDEN, HIDDEN), jnp.float32, -v2, v2)
    std2 = math.sqrt(3.0 / HIDDEN)
    b2 = jax.random.uniform(ks[3], (1, HIDDEN), jnp.float32, -std2, std2)

    w3t = jax.random.uniform(ks[4], (action_dim, HIDDEN), jnp.float32, -EPS, EPS)
    std3 = math.sqrt(3.0 / HIDDEN)
    b3 = jax.random.uniform(ks[5], (1, action_dim), jnp.float32, -std3, std3)

    return {"w1": w1, "b1": b1, "w2": w2, "b2": b2, "w3t": w3t, "b3": b3}


def pack_actor_params(params):
    """Zero-pad hidden 500->512 (exact: padded weights/biases/noise are 0)
    and store weights in bf16; biases stay f32 (tiny)."""
    def pad_to(x, rows, cols):
        return jnp.pad(x, ((0, rows - x.shape[0]), (0, cols - x.shape[1])))

    state_dim = params["w1"].shape[0]
    action_dim = params["w3t"].shape[0]
    HP = HIDDEN_PAD
    return {
        "w1": pad_to(params["w1"], state_dim, HP).astype(jnp.bfloat16),
        "b1": pad_to(params["b1"], 1, HP),
        "w2": pad_to(params["w2"], HP, HP).astype(jnp.bfloat16),
        "b2": pad_to(params["b2"], 1, HP),
        "w3t": pad_to(params["w3t"], action_dim, HP).astype(jnp.bfloat16),
        "b3": params["b3"],
    }


def sample_noise(key, state_dim, action_dim):
    """Fresh epsilon draws per forward (matches torch's .normal_() buffers).
    Drawn at logical shapes and zero-padded so padded rows/cols stay exact;
    weight noise stored bf16, bias noise stays f32 (tiny)."""
    ks = jax.random.split(key, 6)

    def pad_to(x, rows, cols):
        return jnp.pad(x, ((0, rows - x.shape[0]), (0, cols - x.shape[1])))

    e1 = jax.random.normal(ks[0], (state_dim, HIDDEN), jnp.float32)
    eb1 = jax.random.normal(ks[1], (1, HIDDEN), jnp.float32)
    e2 = jax.random.normal(ks[2], (HIDDEN, HIDDEN), jnp.float32)
    eb2 = jax.random.normal(ks[3], (1, HIDDEN), jnp.float32)
    e3t = jax.random.normal(ks[4], (action_dim, HIDDEN), jnp.float32)
    eb3 = jax.random.normal(ks[5], (1, action_dim), jnp.float32)

    return {
        "e1": pad_to(e1, state_dim, HIDDEN_PAD).astype(jnp.bfloat16),
        "eb1": pad_to(eb1, 1, HIDDEN_PAD),
        "e2": pad_to(e2, HIDDEN_PAD, HIDDEN_PAD).astype(jnp.bfloat16),
        "eb2": pad_to(eb2, 1, HIDDEN_PAD),
        "e3t": pad_to(e3t, action_dim, HIDDEN_PAD).astype(jnp.bfloat16),
        "eb3": eb3,
    }


def _reference_forward(state_p, packed, noise, sigmas, action_limit_v, action_limit_w):
    """Pure-JAX reference of the same padded / bf16-operand forward pass."""
    f32 = jnp.float32
    bf16 = jnp.bfloat16

    def layer(x, w, b, e, eb, sw, sb, relu):
        w_eff = (w.astype(f32) + sw * e.astype(f32)).astype(bf16)
        b_eff = b + sb * eb
        y = jnp.dot(x.astype(bf16), w_eff, preferred_element_type=f32) + b_eff
        return jnp.maximum(y, 0.0) if relu else y

    h = layer(state_p, packed["w1"], packed["b1"], noise["e1"], noise["eb1"],
              sigmas[0], sigmas[1], True)
    h = layer(h, packed["w2"], packed["b2"], noise["e2"], noise["eb2"],
              sigmas[2], sigmas[3], True)
    w3_eff = (packed["w3t"].astype(f32) + sigmas[4] * noise["e3t"].astype(f32)).astype(bf16)
    b3_eff = packed["b3"] + sigmas[5] * noise["eb3"]
    a = jax.lax.dot_general(h.astype(bf16), w3_eff,
                            dimension_numbers=(((1,), (1,)), ((), ())),
                            preferred_element_type=f32) + b3_eff
    a0 = jax.nn.sigmoid(a[:, 0]) * action_limit_v
    a1 = jnp.tanh(a[:, 1]) * action_limit_w
    return a.at[:, 0].set(a0).at[:, 1].set(a1)


if __name__ == "__main__":
    batch = 2
    state_dim = 16
    action_dim = 2
    action_limit_v = 0.22
    action_limit_w = 2.0
    sigma_init = 0.017

    key = jax.random.PRNGKey(0)
    k_state, k_params, k_noise = jax.random.split(key, 3)

    state = jax.random.normal(k_state, (batch, state_dim), jnp.float32)
    params = init_actor_params(k_params, state_dim, action_dim)
    packed = pack_actor_params(params)
    noise = sample_noise(k_noise, state_dim, action_dim)
    # per-layer [sigma_weight, sigma_bias] scalars (jnp.full init in the module)
    sigmas = jnp.full((6,), sigma_init, jnp.float32)

    # Batched (2-D state) branch.
    action = actor_forward(state, packed, noise, sigmas,
                           action_limit_v=action_limit_v,
                           action_limit_w=action_limit_w)
    action = jax.block_until_ready(action)

    assert action.shape == (batch, action_dim)
    assert bool(jnp.all(jnp.isfinite(action)))
    assert bool(jnp.all((action[:, 0] >= 0.0) & (action[:, 0] <= action_limit_v + 1e-5)))
    assert bool(jnp.all(jnp.abs(action[:, 1]) <= action_limit_w + 1e-5))

    # Single-state (1-D) branch of Actor.forward (identical math, one row).
    action_single = actor_forward(state[0], packed, noise, sigmas,
                                  action_limit_v=action_limit_v,
                                  action_limit_w=action_limit_w)
    action_single = jax.block_until_ready(action_single)
    assert action_single.shape == (action_dim,)

    # Verify the fused kernel against a pure-JAX reference using the same
    # epsilon draws and the same bf16-operand / f32-accumulation math.
    b_pad = max(SUBLANE, -(-batch // SUBLANE) * SUBLANE)
    state_p = jnp.pad(state, ((0, b_pad - batch), (0, 0)))
    ref = _reference_forward(state_p, packed, noise, sigmas,
                             action_limit_v, action_limit_w)[:batch]
    assert jnp.allclose(action, ref, atol=1e-2, rtol=1e-2), (action, ref)
    assert jnp.allclose(action_single, ref[0], atol=1e-2, rtol=1e-2)

    print("KERNEL_OK")
</pallas_src>

<mosaic_0001>
module attributes {stable_mosaic.version = 11 : i64} {
  func.func @_actor_kernel(%arg0: memref<6xf32, #tpu.memory_space<smem>>, %arg1: memref<8x16xf32, #tpu.memory_space<vmem>>, %arg2: memref<16x512xbf16, #tpu.memory_space<vmem>>, %arg3: memref<1x512xf32, #tpu.memory_space<vmem>>, %arg4: memref<16x512xbf16, #tpu.memory_space<vmem>>, %arg5: memref<1x512xf32, #tpu.memory_space<vmem>>, %arg6: memref<512x512xbf16, #tpu.memory_space<vmem>>, %arg7: memref<1x512xf32, #tpu.memory_space<vmem>>, %arg8: memref<512x512xbf16, #tpu.memory_space<vmem>>, %arg9: memref<1x512xf32, #tpu.memory_space<vmem>>, %arg10: memref<2x512xbf16, #tpu.memory_space<vmem>>, %arg11: memref<1x2xf32, #tpu.memory_space<vmem>>, %arg12: memref<2x512xbf16, #tpu.memory_space<vmem>>, %arg13: memref<1x2xf32, #tpu.memory_space<vmem>>, %arg14: memref<8x2xf32, #tpu.memory_space<vmem>>) attributes {dimension_semantics = [], scalar_prefetch = 0 : i64, scratch_operands = 0 : i64, tpu.core_type = #tpu.core_type<tc>} {
    %c0 = arith.constant 0 : index
    %0 = memref.load %arg0[%c0] : memref<6xf32, #tpu.memory_space<smem>>
    %c1 = arith.constant 1 : index
    %1 = memref.load %arg0[%c1] : memref<6xf32, #tpu.memory_space<smem>>
    %c2 = arith.constant 2 : index
    %2 = memref.load %arg0[%c2] : memref<6xf32, #tpu.memory_space<smem>>
    %c3 = arith.constant 3 : index
    %3 = memref.load %arg0[%c3] : memref<6xf32, #tpu.memory_space<smem>>
    %c4 = arith.constant 4 : index
    %4 = memref.load %arg0[%c4] : memref<6xf32, #tpu.memory_space<smem>>
    %c5 = arith.constant 5 : index
    %5 = memref.load %arg0[%c5] : memref<6xf32, #tpu.memory_space<smem>>
    %c0_0 = arith.constant 0 : index
    %c0_1 = arith.constant 0 : index
    %6 = vector.load %arg1[%c0_0, %c0_1] : memref<8x16xf32, #tpu.memory_space<vmem>>, vector<8x16xf32>
    %c0_2 = arith.constant 0 : index
    %c0_3 = arith.constant 0 : index
    %7 = vector.load %arg2[%c0_2, %c0_3] : memref<16x512xbf16, #tpu.memory_space<vmem>>, vector<16x512xbf16>
    %8 = arith.extf %7 : vector<16x512xbf16> to vector<16x512xf32>
    %c0_4 = arith.constant 0 : index
    %c0_5 = arith.constant 0 : index
    %9 = vector.load %arg4[%c0_4, %c0_5] : memref<16x512xbf16, #tpu.memory_space<vmem>>, vector<16x512xbf16>
    %10 = arith.extf %9 : vector<16x512xbf16> to vector<16x512xf32>
    %11 = vector.broadcast %0 : f32 to vector<16x512xf32>
    %12 = arith.mulf %11, %10 : vector<16x512xf32>
    %13 = arith.addf %8, %12 : vector<16x512xf32>
    %14 = arith.truncf %13 : vector<16x512xf32> to vector<16x512xbf16>
    %c0_6 = arith.constant 0 : index
    %c0_7 = arith.constant 0 : index
    %15 = vector.load %arg3[%c0_6, %c0_7] : memref<1x512xf32, #tpu.memory_space<vmem>>, vector<1x512xf32>
    %c0_8 = arith.constant 0 : index
    %c0_9 = arith.constant 0 : index
    %16 = vector.load %arg5[%c0_8, %c0_9] : memref<1x512xf32, #tpu.memory_space<vmem>>, vector<1x512xf32>
    %17 = vector.broadcast %1 : f32 to vector<1x512xf32>
    %18 = arith.mulf %17, %16 : vector<1x512xf32>
    %19 = arith.addf %15, %18 : vector<1x512xf32>
    %20 = arith.truncf %6 : vector<8x16xf32> to vector<8x16xbf16>
    %cst = arith.constant dense<0.000000e+00> : vector<8x512xf32>
    %21 = tpu.matmul %20, %14, %cst {dimension_numbers = #tpu.dot_dimension_numbers<[1], [0], [0], [1], [0, 0, 1, 1], [], []>} : vector<8x16xbf16>, vector<16x512xbf16>, vector<8x512xf32> -> vector<8x512xf32>
    %22 = vector.broadcast %19 : vector<1x512xf32> to vector<8x512xf32>
    %23 = arith.addf %21, %22 : vector<8x512xf32>
    %cst_10 = arith.constant 0.000000e+00 : f32
    %24 = vector.broadcast %cst_10 : f32 to vector<8x512xf32>
    %25 = arith.maximumf %23, %24 : vector<8x512xf32>
    %c0_11 = arith.constant 0 : index
    %c0_12 = arith.constant 0 : index
    %26 = vector.load %arg6[%c0_11, %c0_12] : memref<512x512xbf16, #tpu.memory_space<vmem>>, vector<512x512xbf16>
    %27 = arith.extf %26 : vector<512x512xbf16> to vector<512x512xf32>
    %c0_13 = arith.constant 0 : index
    %c0_14 = arith.constant 0 : index
    %28 = vector.load %arg8[%c0_13, %c0_14] : memref<512x512xbf16, #tpu.memory_space<vmem>>, vector<512x512xbf16>
    %29 = arith.extf %28 : vector<512x512xbf16> to vector<512x512xf32>
    %30 = vector.broadcast %2 : f32 to vector<512x512xf32>
    %31 = arith.mulf %30, %29 : vector<512x512xf32>
    %32 = arith.addf %27, %31 : vector<512x512xf32>
    %33 = arith.truncf %32 : vector<512x512xf32> to vector<512x512xbf16>
    %c0_15 = arith.constant 0 : index
    %c0_16 = arith.constant 0 : index
    %34 = vector.load %arg7[%c0_15, %c0_16] : memref<1x512xf32, #tpu.memory_space<vmem>>, vector<1x512xf32>
    %c0_17 = arith.constant 0 : index
    %c0_18 = arith.constant 0 : index
    %35 = vector.load %arg9[%c0_17, %c0_18] : memref<1x512xf32, #tpu.memory_space<vmem>>, vector<1x512xf32>
    %36 = vector.broadcast %3 : f32 to vector<1x512xf32>
    %37 = arith.mulf %36, %35 : vector<1x512xf32>
    %38 = arith.addf %34, %37 : vector<1x512xf32>
    %39 = arith.truncf %25 : vector<8x512xf32> to vector<8x512xbf16>
    %cst_19 = arith.constant dense<0.000000e+00> : vector<8x512xf32>
    %40 = tpu.matmul %39, %33, %cst_19 {dimension_numbers = #tpu.dot_dimension_numbers<[1], [0], [0], [1], [0, 0, 1, 1], [], []>} : vector<8x512xbf16>, vector<512x512xbf16>, vector<8x512xf32> -> vector<8x512xf32>
    %41 = vector.broadcast %38 : vector<1x512xf32> to vector<8x512xf32>
    %42 = arith.addf %40, %41 : vector<8x512xf32>
    %cst_20 = arith.constant 0.000000e+00 : f32
    %43 = vector.broadcast %cst_20 : f32 to vector<8x512xf32>
    %44 = arith.maximumf %42, %43 : vector<8x512xf32>
    %c0_21 = arith.constant 0 : index
    %c0_22 = arith.constant 0 : index
    %45 = vector.load %arg10[%c0_21, %c0_22] : memref<2x512xbf16, #tpu.memory_space<vmem>>, vector<2x512xbf16>
    %46 = arith.extf %45 : vector<2x512xbf16> to vector<2x512xf32>
    %c0_23 = arith.constant 0 : index
    %c0_24 = arith.constant 0 : index
    %47 = vector.load %arg12[%c0_23, %c0_24] : memref<2x512xbf16, #tpu.memory_space<vmem>>, vector<2x512xbf16>
    %48 = arith.extf %47 : vector<2x512xbf16> to vector<2x512xf32>
    %49 = vector.broadcast %4 : f32 to vector<2x512xf32>
    %50 = arith.mulf %49, %48 : vector<2x512xf32>
    %51 = arith.addf %46, %50 : vector<2x512xf32>
    %52 = arith.truncf %51 : vector<2x512xf32> to vector<2x512xbf16>
    %c0_25 = arith.constant 0 : index
    %c0_26 = arith.constant 0 : index
    %53 = vector.load %arg11[%c0_25, %c0_26] : memref<1x2xf32, #tpu.memory_space<vmem>>, vector<1x2xf32>
    %c0_27 = arith.constant 0 : index
    %c0_28 = arith.constant 0 : index
    %54 = vector.load %arg13[%c0_27, %c0_28] : memref<1x2xf32, #tpu.memory_space<vmem>>, vector<1x2xf32>
    %55 = vector.broadcast %5 : f32 to vector<1x2xf32>
    %56 = arith.mulf %55, %54 : vector<1x2xf32>
    %57 = arith.addf %53, %56 : vector<1x2xf32>
    %58 = arith.truncf %44 : vector<8x512xf32> to vector<8x512xbf16>
    %cst_29 = arith.constant dense<0.000000e+00> : vector<8x2xf32>
    %59 = tpu.matmul %58, %52, %cst_29 {dimension_numbers = #tpu.dot_dimension_numbers<[1], [1], [0], [0], [0, 0, 1, 0], [], []>} : vector<8x512xbf16>, vector<2x512xbf16>, vector<8x2xf32> -> vector<8x2xf32>
    %60 = vector.broadcast %57 : vector<1x2xf32> to vector<8x2xf32>
    %61 = arith.addf %59, %60 : vector<8x2xf32>
    %62 = tpu.iota {dimensions = array<i32: 1>} : vector<8x2xi32>
    %63 = arith.negf %61 : vector<8x2xf32>
    %64 = math.exp %63 : vector<8x2xf32>
    %cst_30 = arith.constant 1.000000e+00 : f32
    %65 = vector.broadcast %cst_30 : f32 to vector<8x2xf32>
    %66 = arith.addf %65, %64 : vector<8x2xf32>
    %67 = arith.divf %65, %66 : vector<8x2xf32>
    %cst_31 = arith.constant 2.200000e-01 : f32
    %68 = vector.broadcast %cst_31 : f32 to vector<8x2xf32>
    %69 = arith.mulf %67, %68 : vector<8x2xf32>
    %70 = math.tanh %61 : vector<8x2xf32>
    %cst_32 = arith.constant 2.000000e+00 : f32
    %71 = vector.broadcast %cst_32 : f32 to vector<8x2xf32>
    %72 = arith.mulf %70, %71 : vector<8x2xf32>
    %c0_i32 = arith.constant 0 : i32
    %73 = vector.broadcast %c0_i32 : i32 to vector<8x2xi32>
    %74 = arith.cmpi eq, %62, %73 : vector<8x2xi32>
    %c1_i32 = arith.constant 1 : i32
    %75 = vector.broadcast %c1_i32 : i32 to vector<8x2xi32>
    %76 = arith.cmpi eq, %62, %75 : vector<8x2xi32>
    %77 = arith.select %76, %72, %61 : vector<8x2xi1>, vector<8x2xf32>
    %78 = arith.select %74, %69, %77 : vector<8x2xi1>, vector<8x2xf32>
    %c0_33 = arith.constant 0 : index
    %c0_34 = arith.constant 0 : index
    %79 = vector.load %arg14[%c0_33, %c0_34] : memref<8x2xf32, #tpu.memory_space<vmem>>, vector<8x2xf32>
    tpu.vector_store %arg14[%c0_33, %c0_34], %78 {strides = array<i32>} : memref<8x2xf32, #tpu.memory_space<vmem>>, vector<8x2xf32>,
    return
  }
}

</mosaic_0001>

<llo_original>
// kernel: tpu_custom_call.1
$region0: #{tpu_custom_call.1}
  #allocation0 [shape = 'u32[]', space=smem, size = 0x4, offset = 0x4, fixed_abs, tag = 'smem constant byte address 0x4 - core index']
  #allocation1 [shape = 'u32[72,128]{1,0:T(1,128)}', space=vmem, size = 0x9000, scoped, tag = 'internal scratch']
  %s0 = inlined_call_operand.hbm [shape: f32[6], index: 0, kind: input, shape index: {}]
  %s1 = inlined_call_operand.hbm [shape: f32[8,16], index: 1, kind: input, shape index: {}]
  %s2 = inlined_call_operand.hbm [shape: bf16[16,512], index: 2, kind: input, shape index: {}]
  %s3 = inlined_call_operand.hbm [shape: f32[1,512], index: 3, kind: input, shape index: {}]
  %s4 = inlined_call_operand.hbm [shape: bf16[16,512], index: 4, kind: input, shape index: {}]
  %s5 = inlined_call_operand.vmem [shape: f32[1,512], index: 5, kind: input, shape index: {}]
  %s6 = inlined_call_operand.hbm [shape: bf16[512,512], index: 6, kind: input, shape index: {}]
  %s7 = inlined_call_operand.hbm [shape: f32[1,512], index: 7, kind: input, shape index: {}]
  %s8 = inlined_call_operand.hbm [shape: bf16[512,512], index: 8, kind: input, shape index: {}]
  %s9 = inlined_call_operand.vmem [shape: f32[1,512], index: 9, kind: input, shape index: {}]
  %s10 = inlined_call_operand.hbm [shape: bf16[2,512], index: 10, kind: input, shape index: {}]
  %s11 = inlined_call_operand.vmem [shape: f32[1,2], index: 11, kind: input, shape index: {}]
  %s12 = inlined_call_operand.hbm [shape: bf16[2,512], index: 12, kind: input, shape index: {}]
  %s13 = inlined_call_operand.vmem [shape: f32[1,2], index: 13, kind: input, shape index: {}]
  %s14 = inlined_call_operand.vmem [shape: f32[8,2], index: 14, kind: output, shape index: {}]
  %s15 = sld [smem:[#allocation0]]
  $region106: #{tpu_custom_call.1} parent=0
    _
  %s17 = ssub.s32 1, %s15
  %s18 = scalar_select 0, %s17, %s15
  $region1: #{tpu_custom_call.1} parent=0
    #allocation2 [shape = 'u8[512]{0}', space=smem, size = 0x200, scoped, tag = 'input window, operand 0, single buffered']
    #allocation3 [shape = 's32[1]{0}', space=sflag, size = 0x4, scoped, tag = 'scoped memory for tpu_custom_call.1']
    #allocation4 [shape = 's32[1]{0}', space=sflag, size = 0x4, scoped, tag = 'scoped memory for tpu_custom_call.1']
    #allocation5 [shape = 'u8[4096]{0}', space=vmem, size = 0x1000, scoped, tag = 'input window, operand 1, single buffered']
    #allocation6 [shape = 'u8[16384]{0}', space=vmem, size = 0x4000, scoped, tag = 'input window, operand 2, single buffered']
    #allocation7 [shape = 's32[1]{0}', space=sflag, size = 0x4, scoped, tag = 'scoped memory for tpu_custom_call.1']
    #allocation8 [shape = 'u8[2048]{0}', space=vmem, size = 0x800, scoped, tag = 'input window, operand 3, single buffered']
    #allocation9 [shape = 'u8[16384]{0}', space=vmem, size = 0x4000, scoped, tag = 'input window, operand 4, single buffered']
    #allocation10 [shape = 's32[1]{0}', space=sflag, size = 0x4, scoped, tag = 'scoped memory for tpu_custom_call.1']
    #allocation11 [shape = 'u8[524288]{0}', space=vmem, size = 0x80000, scoped, tag = 'input window, operand 6, single buffered']
    #allocation12 [shape = 'u8[2048]{0}', space=vmem, size = 0x800, scoped, tag = 'input window, operand 7, single buffered']
    #allocation13 [shape = 's32[1]{0}', space=sflag, size = 0x4, scoped, tag = 'scoped memory for tpu_custom_call.1']
    #allocation14 [shape = 'u8[524288]{0}', space=vmem, size = 0x80000, scoped, tag = 'input window, operand 8, single buffered']
    #allocation15 [shape = 'u8[2048]{0}', space=vmem, size = 0x800, scoped, tag = 'input window, operand 10, single buffered']
    #allocation16 [shape = 's32[1]{0}', space=sflag, size = 0x4, scoped, tag = 'scoped memory for tpu_custom_call.1']
    #allocation17 [shape = 'u8[2048]{0}', space=vmem, size = 0x800, scoped, tag = 'input window, operand 12, single buffered']
    %19 = vsyncpa [#allocation4], 0
    %20 = vsyncpa [#allocation3], 0
    %21 = vsyncpa [#allocation7], 0
    %22 = vsyncpa [#allocation10], 0
    %23 = vsyncpa [#allocation13], 0
    %24 = vsyncpa [#allocation16], 0
    // Predicated region
    $region2: #{tpu_custom_call.1} parent=1 // pred_check
      _
    $region3: #{tpu_custom_call.1} parent=1 // pred_check_branch
      %26 = sbr.rel (0) target = $region5
    $region4: #{tpu_custom_call.1} parent=1 // pred_region
      %28 = vsyncadd [#allocation4], 0
      %s30 = sshll.u32 %s0, 4
      %s31 = int_to_ptr.hbm [resolvable:$true] %s30
      %33 = dma.hbm_to_smem %s31, 16, [#allocation2], [#allocation4]
    $region5: #{tpu_custom_call.1} parent=1 // pred_fallthru
      _
    // Predicated region
    $region6: #{tpu_custom_call.1} parent=1 // pred_check
      _
    $region7: #{tpu_custom_call.1} parent=1 // pred_check_branch
      %35 = sbr.rel (0) target = $region9
    $region8: #{tpu_custom_call.1} parent=1 // pred_region
      %37 = vsyncadd [#allocation3], 0
      %s39 = sshll.u32 %s1, 4
      %s40 = int_to_ptr.hbm [resolvable:$true] %s39
      %s41 = sshll.u32 [#allocation5], 4
      %s42 = int_to_ptr.vmem [resolvable:$true] %s41
      %44 = dma.hbm_to_vmem [thread:$0]  %s40, 128, %s42, [#allocation3]
    $region9: #{tpu_custom_call.1} parent=1 // pred_fallthru
      _
    // Predicated region
    $region10: #{tpu_custom_call.1} parent=1 // pred_check
      _
    $region11: #{tpu_custom_call.1} parent=1 // pred_check_branch
      %46 = sbr.rel (0) target = $region13
    $region12: #{tpu_custom_call.1} parent=1 // pred_region
      %48 = vsyncadd [#allocation7], 0
      %s49 = sshll.u32 %s2, 4
      %s50 = int_to_ptr.hbm [resolvable:$true] %s49
      %s51 = sshll.u32 [#allocation6], 4
      %s52 = int_to_ptr.vmem [resolvable:$true] %s51
      %57 = dma.hbm_to_vmem [thread:$0]  %s50, 512, %s52, [#allocation7], 256, 256, 16
    $region13: #{tpu_custom_call.1} parent=1 // pred_fallthru
      _
    // Predicated region
    $region14: #{tpu_custom_call.1} parent=1 // pred_check
      _
    $region15: #{tpu_custom_call.1} parent=1 // pred_check_branch
      %59 = sbr.rel (0) target = $region17
    $region16: #{tpu_custom_call.1} parent=1 // pred_region
      %61 = vsyncadd [#allocation7], 0
      %s63 = sshll.u32 %s3, 4
      %s64 = int_to_ptr.hbm [resolvable:$true] %s63
      %s65 = sshll.u32 [#allocation8], 4
      %s66 = int_to_ptr.vmem [resolvable:$true] %s65
      %68 = dma.hbm_to_vmem [thread:$0]  %s64, 64, %s66, [#allocation7]
    $region17: #{tpu_custom_call.1} parent=1 // pred_fallthru
      _
    // Predicated region
    $region18: #{tpu_custom_call.1} parent=1 // pred_check
      _
    $region19: #{tpu_custom_call.1} parent=1 // pred_check_branch
      %70 = sbr.rel (0) target = $region21
    $region20: #{tpu_custom_call.1} parent=1 // pred_region
      %72 = vsyncadd [#allocation10], 0
      %s73 = sshll.u32 %s4, 4
      %s74 = int_to_ptr.hbm [resolvable:$true] %s73
      %s75 = sshll.u32 [#allocation9], 4
      %s76 = int_to_ptr.vmem [resolvable:$true] %s75
      %81 = dma.hbm_to_vmem [thread:$0]  %s74, 512, %s76, [#allocation10], 256, 256, 16
    $region21: #{tpu_custom_call.1} parent=1 // pred_fallthru
      _
    // Predicated region
    $region22: #{tpu_custom_call.1} parent=1 // pred_check
      _
    $region23: #{tpu_custom_call.1} parent=1 // pred_check_branch
      %83 = sbr.rel (0) target = $region25
    $region24: #{tpu_custom_call.1} parent=1 // pred_region
      _
    $region25: #{tpu_custom_call.1} parent=1 // pred_fallthru
      _
    // Predicated region
    $region26: #{tpu_custom_call.1} parent=1 // pred_check
      _
    $region27: #{tpu_custom_call.1} parent=1 // pred_check_branch
      %85 = sbr.rel (0) target = $region29
    $region28: #{tpu_custom_call.1} parent=1 // pred_region
      %87 = vsyncadd [#allocation10], 0
      %s88 = sshll.u32 %s6, 4
      %s89 = int_to_ptr.hbm [resolvable:$true] %s88
      %s90 = sshll.u32 [#allocation11], 4
      %s91 = int_to_ptr.vmem [resolvable:$true] %s90
      %96 = dma.hbm_to_vmem [thread:$0]  %s89, 16384, %s91, [#allocation10], 256, 256, 16
    $region29: #{tpu_custom_call.1} parent=1 // pred_fallthru
      _
    // Predicated region
    $region30: #{tpu_custom_call.1} parent=1 // pred_check
      _
    $region31: #{tpu_custom_call.1} parent=1 // pred_check_branch
      %98 = sbr.rel (0) target = $region33
    $region32: #{tpu_custom_call.1} parent=1 // pred_region
      %100 = vsyncadd [#allocation13], 0
      %s102 = sshll.u32 %s7, 4
      %s103 = int_to_ptr.hbm [resolvable:$true] %s102
      %s104 = sshll.u32 [#allocation12], 4
      %s105 = int_to_ptr.vmem [resolvable:$true] %s104
      %107 = dma.hbm_to_vmem [thread:$0]  %s103, 64, %s105, [#allocation13]
    $region33: #{tpu_custom_call.1} parent=1 // pred_fallthru
      _
    // Predicated region
    $region34: #{tpu_custom_call.1} parent=1 // pred_check
      _
    $region35: #{tpu_custom_call.1} parent=1 // pred_check_branch
      %109 = sbr.rel (0) target = $region37
    $region36: #{tpu_custom_call.1} parent=1 // pred_region
      %111 = vsyncadd [#allocation13], 0
      %s112 = sshll.u32 %s8, 4
      %s113 = int_to_ptr.hbm [resolvable:$true] %s112
      %s114 = sshll.u32 [#allocation14], 4
      %s115 = int_to_ptr.vmem [resolvable:$true] %s114
      %120 = dma.hbm_to_vmem [thread:$0]  %s113, 16384, %s115, [#allocation13], 256, 256, 16
    $region37: #{tpu_custom_call.1} parent=1 // pred_fallthru
      _
    // Predicated region
    $region38: #{tpu_custom_call.1} parent=1 // pred_check
      _
    $region39: #{tpu_custom_call.1} parent=1 // pred_check_branch
      %122 = sbr.rel (0) target = $region41
    $region40: #{tpu_custom_call.1} parent=1 // pred_region
      _
    $region41: #{tpu_custom_call.1} parent=1 // pred_fallthru
      _
    // Predicated region
    $region42: #{tpu_custom_call.1} parent=1 // pred_check
      _
    $region43: #{tpu_custom_call.1} parent=1 // pred_check_branch
      %124 = sbr.rel (0) target = $region45
    $region44: #{tpu_custom_call.1} parent=1 // pred_region
      %126 = vsyncadd [#allocation16], 0
      %s128 = sshll.u32 %s10, 4
      %s129 = int_to_ptr.hbm [resolvable:$true] %s128
      %s130 = sshll.u32 [#allocation15], 4
      %s131 = int_to_ptr.vmem [resolvable:$true] %s130
      %133 = dma.hbm_to_vmem [thread:$0]  %s129, 64, %s131, [#allocation16]
    $region45: #{tpu_custom_call.1} parent=1 // pred_fallthru
      _
    // Predicated region
    $region46: #{tpu_custom_call.1} parent=1 // pred_check
      _
    $region47: #{tpu_custom_call.1} parent=1 // pred_check_branch
      %135 = sbr.rel (0) target = $region49
    $region48: #{tpu_custom_call.1} parent=1 // pred_region
      _
    $region49: #{tpu_custom_call.1} parent=1 // pred_fallthru
      _
    // Predicated region
    $region50: #{tpu_custom_call.1} parent=1 // pred_check
      _
    $region51: #{tpu_custom_call.1} parent=1 // pred_check_branch
      %137 = sbr.rel (0) target = $region53
    $region52: #{tpu_custom_call.1} parent=1 // pred_region
      %139 = vsyncadd [#allocation16], 0
      %s141 = sshll.u32 %s12, 4
      %s142 = int_to_ptr.hbm [resolvable:$true] %s141
      %s143 = sshll.u32 [#allocation17], 4
      %s144 = int_to_ptr.vmem [resolvable:$true] %s143
      %146 = dma.hbm_to_vmem [thread:$0]  %s142, 64, %s144, [#allocation16]
    $region53: #{tpu_custom_call.1} parent=1 // pred_fallthru
      _
    // Predicated region
    $region54: #{tpu_custom_call.1} parent=1 // pred_check
      _
    $region55: #{tpu_custom_call.1} parent=1 // pred_check_branch
      %148 = sbr.rel (0) target = $region57
    $region56: #{tpu_custom_call.1} parent=1 // pred_region
      _
    $region57: #{tpu_custom_call.1} parent=1 // pred_fallthru
      _
    // Predicated region
    $region58: #{tpu_custom_call.1} parent=1 // pred_check
      _
    $region59: #{tpu_custom_call.1} parent=1 // pred_check_branch
      %150 = sbr.rel (0) target = $region61
    $region60: #{tpu_custom_call.1} parent=1 // pred_region
      %152 = dma.done [#allocation4], 16
    $region61: #{tpu_custom_call.1} parent=1 // pred_fallthru
      _
    // Predicated region
    $region62: #{tpu_custom_call.1} parent=1 // pred_check
      _
    $region63: #{tpu_custom_call.1} parent=1 // pred_check_branch
      %154 = sbr.rel (0) target = $region65
    $region64: #{tpu_custom_call.1} parent=1 // pred_region
      %156 = dma.done [#allocation3], 128
    $region65: #{tpu_custom_call.1} parent=1 // pred_fallthru
      _
    // Predicated region
    $region66: #{tpu_custom_call.1} parent=1 // pred_check
      _
    $region67: #{tpu_custom_call.1} parent=1 // pred_check_branch
      %158 = sbr.rel (0) target = $region69
    $region68: #{tpu_custom_call.1} parent=1 // pred_region
      %160 = dma.done [#allocation7], 512
    $region69: #{tpu_custom_call.1} parent=1 // pred_fallthru
      _
    // Predicated region
    $region70: #{tpu_custom_call.1} parent=1 // pred_check
      _
    $region71: #{tpu_custom_call.1} parent=1 // pred_check_branch
      %162 = sbr.rel (0) target = $region73
    $region72: #{tpu_custom_call.1} parent=1 // pred_region
      %164 = dma.done [#allocation7], 64
    $region73: #{tpu_custom_call.1} parent=1 // pred_fallthru
      _
    // Predicated region
    $region74: #{tpu_custom_call.1} parent=1 // pred_check
      _
    $region75: #{tpu_custom_call.1} parent=1 // pred_check_branch
      %166 = sbr.rel (0) target = $region77
    $region76: #{tpu_custom_call.1} parent=1 // pred_region
      %168 = dma.done [#allocation10], 512
    $region77: #{tpu_custom_call.1} parent=1 // pred_fallthru
      _
    // Predicated region
    $region78: #{tpu_custom_call.1} parent=1 // pred_check
      _
    $region79: #{tpu_custom_call.1} parent=1 // pred_check_branch
      %170 = sbr.rel (0) target = $region81
    $region80: #{tpu_custom_call.1} parent=1 // pred_region
      %172 = dma.done [#allocation10], 16384
    $region81: #{tpu_custom_call.1} parent=1 // pred_fallthru
      _
    // Predicated region
    $region82: #{tpu_custom_call.1} parent=1 // pred_check
      _
    $region83: #{tpu_custom_call.1} parent=1 // pred_check_branch
      %174 = sbr.rel (0) target = $region85
    $region84: #{tpu_custom_call.1} parent=1 // pred_region
      %176 = dma.done [#allocation13], 64
    $region85: #{tpu_custom_call.1} parent=1 // pred_fallthru
      _
    // Predicated region
    $region86: #{tpu_custom_call.1} parent=1 // pred_check
      _
    $region87: #{tpu_custom_call.1} parent=1 // pred_check_branch
      %178 = sbr.rel (0) target = $region89
    $region88: #{tpu_custom_call.1} parent=1 // pred_region
      %180 = dma.done [#allocation13], 16384
    $region89: #{tpu_custom_call.1} parent=1 // pred_fallthru
      _
    // Predicated region
    $region90: #{tpu_custom_call.1} parent=1 // pred_check
      _
    $region91: #{tpu_custom_call.1} parent=1 // pred_check_branch
      %182 = sbr.rel (0) target = $region93
    $region92: #{tpu_custom_call.1} parent=1 // pred_region
      %184 = dma.done [#allocation16], 64
    $region93: #{tpu_custom_call.1} parent=1 // pred_fallthru
      _
    // Predicated region
    $region94: #{tpu_custom_call.1} parent=1 // pred_check
      _
    $region95: #{tpu_custom_call.1} parent=1 // pred_check_branch
      %186 = sbr.rel (0) target = $region97
    $region96: #{tpu_custom_call.1} parent=1 // pred_region
      %188 = dma.done [#allocation16], 64
    $region97: #{tpu_custom_call.1} parent=1 // pred_fallthru
      _
    %189 = sfence
    %s191 = sld [smem:[#allocation2]]
    %s192 = sld [smem:[#allocation2 + $0x1]]
    %s193 = sld [smem:[#allocation2 + $0x2]]
    %s194 = sld [smem:[#allocation2 + $0x3]]
    %s195 = sld [smem:[#allocation2 + $0x4]]
    %s196 = sld [smem:[#allocation2 + $0x5]]
    %v197 = vld [vmem:[#allocation5] sm:$0xff]
    %v198 = vld [vmem:[#allocation6] sm:$0xff]
    %v199 = vld [vmem:[#allocation6 + $0x8] sm:$0xff]
    %v200 = vld [vmem:[#allocation6 + $0x10] sm:$0xff]
    %v201 = vld [vmem:[#allocation6 + $0x18] sm:$0xff]
    %v202 = vunpack.c.l.bf16 %v198
    %v203 = vunpack.c.h.bf16 %v198
    %v204 = vunpack.c.l.bf16 %v199
    %v205 = vunpack.c.h.bf16 %v199
    %v206 = vunpack.c.l.bf16 %v200
    %v207 = vunpack.c.h.bf16 %v200
    %v208 = vunpack.c.l.bf16 %v201
    %v209 = vunpack.c.h.bf16 %v201
    %v210 = vld [vmem:[#allocation9] sm:$0xff]
    %v211 = vld [vmem:[#allocation9 + $0x8] sm:$0xff]
    %v212 = vld [vmem:[#allocation9 + $0x10] sm:$0xff]
    %v213 = vld [vmem:[#allocation9 + $0x18] sm:$0xff]
    %v214 = vunpack.c.l.bf16 %v210
    %v215 = vunpack.c.h.bf16 %v210
    %v216 = vunpack.c.l.bf16 %v211
    %v217 = vunpack.c.h.bf16 %v211
    %v218 = vunpack.c.l.bf16 %v212
    %v219 = vunpack.c.h.bf16 %v212
    %v220 = vunpack.c.l.bf16 %v213
    %v221 = vunpack.c.h.bf16 %v213
    %v222 = vstv %s191
    %v223 = vmul.f32 %v222, %v214
    %v224 = vmul.f32 %v222, %v215
    %v225 = vmul.f32 %v222, %v216
    %v226 = vmul.f32 %v222, %v217
    %v227 = vmul.f32 %v222, %v218
    %v228 = vmul.f32 %v222, %v219
    %v229 = vmul.f32 %v222, %v220
    %v230 = vmul.f32 %v222, %v221
    %v231 = vadd.f32 %v202, %v223
    %v232 = vadd.f32 %v203, %v224
    %v233 = vadd.f32 %v204, %v225
    %v234 = vadd.f32 %v205, %v226
    %v235 = vadd.f32 %v206, %v227
    %v236 = vadd.f32 %v207, %v228
    %v237 = vadd.f32 %v208, %v229
    %v238 = vadd.f32 %v209, %v230
    %v239 = vpack.c.bf16 %v235, %v231
    %v240 = vpack.c.bf16 %v236, %v232
    %v241 = vpack.c.bf16 %v237, %v233
    %v242 = vpack.c.bf16 %v238, %v234
    %v243 = vld [vmem:[#allocation8] sm:$0xf]
    %v244 = vld [vmem:[%s5] sm:$0xf]
    %v245 = vstv %s192
    %v246 = vmul.f32 %v245, %v244
    %v247 = vadd.f32 %v243, %v246
    %v248 = vpack.c.bf16 %v197, %v197
    %v250 = vperm.slane %v247, 0
    %v251 = vperm.slane %v247, 1
    %v252 = vperm.slane %v247, 2
    %v253 = vperm.slane %v247, 3
    %vm258 = vcmask 130048
    %v260 = vsel %vm258, %v248, 0
    %262 = vmatpush.bf16.msra.mxu0 0
    %263 = vmatpush.bf16.msra.mxu0 0
    %264 = vmatpush.bf16.msra.mxu0 0
    %265 = vmatpush.bf16.msra.mxu0 0
    %266 = vmatpush.bf16.msra.mxu0 0
    %267 = vmatpush.bf16.msra.mxu0 0
    %268 = vmatpush.bf16.msra.mxu0 0
    %269 = vmatpush.bf16.msra.mxu0 %v239
    %270 = vmatmul.bf16.gmra.mxu0 %v260
    %v271 = vpop.f32.mrf.mxu0
    %v272 = vadd.f32 %v250, %v271
    %v273 = vpop.f32.mrf.mxu0
    %274 = vdwg.mxu0
    %275 = vmatpush.bf16.msra.mxu0 0
    %276 = vmatpush.bf16.msra.mxu0 0
    %277 = vmatpush.bf16.msra.mxu0 0
    %278 = vmatpush.bf16.msra.mxu0 0
    %279 = vmatpush.bf16.msra.mxu0 0
    %280 = vmatpush.bf16.msra.mxu0 0
    %281 = vmatpush.bf16.msra.mxu0 0
    %282 = vmatpush.bf16.msra.mxu0 %v240
    %283 = vmatmul.bf16.gmra.mxu0 %v260
    %v284 = vpop.f32.mrf.mxu0
    %v285 = vadd.f32 %v251, %v284
    %v286 = vpop.f32.mrf.mxu0
    %287 = vdwg.mxu0
    %288 = vmatpush.bf16.msra.mxu0 0
    %289 = vmatpush.bf16.msra.mxu0 0
    %290 = vmatpush.bf16.msra.mxu0 0
    %291 = vmatpush.bf16.msra.mxu0 0
    %292 = vmatpush.bf16.msra.mxu0 0
    %293 = vmatpush.bf16.msra.mxu0 0
    %294 = vmatpush.bf16.msra.mxu0 0
    %295 = vmatpush.bf16.msra.mxu0 %v241
    %296 = vmatmul.bf16.gmra.mxu0 %v260
    %v297 = vpop.f32.mrf.mxu0
    %v298 = vadd.f32 %v252, %v297
    %v299 = vpop.f32.mrf.mxu0
    %300 = vdwg.mxu0
    %301 = vmatpush.bf16.msra.mxu0 0
    %302 = vmatpush.bf16.msra.mxu0 0
    %303 = vmatpush.bf16.msra.mxu0 0
    %304 = vmatpush.bf16.msra.mxu0 0
    %305 = vmatpush.bf16.msra.mxu0 0
    %306 = vmatpush.bf16.msra.mxu0 0
    %307 = vmatpush.bf16.msra.mxu0 0
    %308 = vmatpush.bf16.msra.mxu0 %v242
    %309 = vmatmul.bf16.gmra.mxu0 %v260
    %v310 = vpop.f32.mrf.mxu0
    %v311 = vadd.f32 %v253, %v310
    %v312 = vpop.f32.mrf.mxu0
    %313 = vdwg.mxu0
    %v314 = vmax.f32 %v272, 0.0
    %v315 = vmax.f32 %v285, 0.0
    %v316 = vmax.f32 %v298, 0.0
    %v317 = vmax.f32 %v311, 0.0
    %v318 = vld [vmem:[#allocation11] sm:$0xff]
    %v319 = vld [vmem:[#allocation11 + $0x8] sm:$0xff]
    %v320 = vld [vmem:[#allocation11 + $0x10] sm:$0xff]
    %v321 = vld [vmem:[#allocation11 + $0x18] sm:$0xff]
    %v322 = vld [vmem:[#allocation11 + $0x20] sm:$0xff]
    %v323 = vld [vmem:[#allocation11 + $0x28] sm:$0xff]
    %v324 = vld [vmem:[#allocation11 + $0x30] sm:$0xff]
    %v325 = vld [vmem:[#allocation11 + $0x38] sm:$0xff]
    %v326 = vld [vmem:[#allocation11 + $0x40] sm:$0xff]
    %v327 = vld [vmem:[#allocation11 + $0x48] sm:$0xff]
    %v328 = vld [vmem:[#allocation11 + $0x50] sm:$0xff]
    %v329 = vld [vmem:[#allocation11 + $0x58] sm:$0xff]
    %v330 = vld [vmem:[#allocation11 + $0x60] sm:$0xff]
    %v331 = vld [vmem:[#allocation11 + $0x68] sm:$0xff]
    %v332 = vld [vmem:[#allocation11 + $0x70] sm:$0xff]
    %v333 = vld [vmem:[#allocation11 + $0x78] sm:$0xff]
    %v334 = vld [vmem:[#allocation11 + $0x80] sm:$0xff]
    %v335 = vld [vmem:[#allocation11 + $0x88] sm:$0xff]
    %v336 = vld [vmem:[#allocation11 + $0x90] sm:$0xff]
    %v337 = vld [vmem:[#allocation11 + $0x98] sm:$0xff]
    %v338 = vld [vmem:[#allocation11 + $0xa0] sm:$0xff]
    %v339 = vld [vmem:[#allocation11 + $0xa8] sm:$0xff]
    %v340 = vld [vmem:[#allocation11 + $0xb0] sm:$0xff]
    %v341 = vld [vmem:[#allocation11 + $0xb8] sm:$0xff]
    %v342 = vld [vmem:[#allocation11 + $0xc0] sm:$0xff]
    %v343 = vld [vmem:[#allocation11 + $0xc8] sm:$0xff]
    %v344 = vld [vmem:[#allocation11 + $0xd0] sm:$0xff]
    %v345 = vld [vmem:[#allocation11 + $0xd8] sm:$0xff]
    %v346 = vld [vmem:[#allocation11 + $0xe0] sm:$0xff]
    %v347 = vld [vmem:[#allocation11 + $0xe8] sm:$0xff]
    %v348 = vld [vmem:[#allocation11 + $0xf0] sm:$0xff]
    %v349 = vld [vmem:[#allocation11 + $0xf8] sm:$0xff]
    %v350 = vld [vmem:[#allocation11 + $0x100] sm:$0xff]
    %v351 = vld [vmem:[#allocation11 + $0x108] sm:$0xff]
    %v352 = vld [vmem:[#allocation11 + $0x110] sm:$0xff]
    %v353 = vld [vmem:[#allocation11 + $0x118] sm:$0xff]
    %v354 = vld [vmem:[#allocation11 + $0x120] sm:$0xff]
    %v355 = vld [vmem:[#allocation11 + $0x128] sm:$0xff]
    %v356 = vld [vmem:[#allocation11 + $0x130] sm:$0xff]
    %v357 = vld [vmem:[#allocation11 + $0x138] sm:$0xff]
    %v358 = vld [vmem:[#allocation11 + $0x140] sm:$0xff]
    %v359 = vld [vmem:[#allocation11 + $0x148] sm:$0xff]
    %v360 = vld [vmem:[#allocation11 + $0x150] sm:$0xff]
    %v361 = vld [vmem:[#allocation11 + $0x158] sm:$0xff]
    %v362 = vld [vmem:[#allocation11 + $0x160] sm:$0xff]
    %v363 = vld [vmem:[#allocation11 + $0x168] sm:$0xff]
    %v364 = vld [vmem:[#allocation11 + $0x170] sm:$0xff]
    %v365 = vld [vmem:[#allocation11 + $0x178] sm:$0xff]
    %v366 = vld [vmem:[#allocation11 + $0x180] sm:$0xff]
    %v367 = vld [vmem:[#allocation11 + $0x188] sm:$0xff]
    %v368 = vld [vmem:[#allocation11 + $0x190] sm:$0xff]
    %v369 = vld [vmem:[#allocation11 + $0x198] sm:$0xff]
    %v370 = vld [vmem:[#allocation11 + $0x1a0] sm:$0xff]
    %v371 = vld [vmem:[#allocation11 + $0x1a8] sm:$0xff]
    %v372 = vld [vmem:[#allocation11 + $0x1b0] sm:$0xff]
    %v373 = vld [vmem:[#allocation11 + $0x1b8] sm:$0xff]
    %v374 = vld [vmem:[#allocation11 + $0x1c0] sm:$0xff]
    %v375 = vld [vmem:[#allocation11 + $0x1c8] sm:$0xff]
    %v376 = vld [vmem:[#allocation11 + $0x1d0] sm:$0xff]
    %v377 = vld [vmem:[#allocation11 + $0x1d8] sm:$0xff]
    %v378 = vld [vmem:[#allocation11 + $0x1e0] sm:$0xff]
    %v379 = vld [vmem:[#allocation11 + $0x1e8] sm:$0xff]
    %v380 = vld [vmem:[#allocation11 + $0x1f0] sm:$0xff]
    %v381 = vld [vmem:[#allocation11 + $0x1f8] sm:$0xff]
    %v382 = vld [vmem:[#allocation11 + $0x200] sm:$0xff]
    %v383 = vld [vmem:[#allocation11 + $0x208] sm:$0xff]
    %v384 = vld [vmem:[#allocation11 + $0x210] sm:$0xff]
    %v385 = vld [vmem:[#allocation11 + $0x218] sm:$0xff]
    %v386 = vld [vmem:[#allocation11 + $0x220] sm:$0xff]
    %v387 = vld [vmem:[#allocation11 + $0x228] sm:$0xff]
    %v388 = vld [vmem:[#allocation11 + $0x230] sm:$0xff]
    %v389 = vld [vmem:[#allocation11 + $0x238] sm:$0xff]
    %v390 = vld [vmem:[#allocation11 + $0x240] sm:$0xff]
    %v391 = vld [vmem:[#allocation11 + $0x248] sm:$0xff]
    %v392 = vld [vmem:[#allocation11 + $0x250] sm:$0xff]
    %v393 = vld [vmem:[#allocation11 + $0x258] sm:$0xff]
    %v394 = vld [vmem:[#allocation11 + $0x260] sm:$0xff]
    %v395 = vld [vmem:[#allocation11 + $0x268] sm:$0xff]
    %v396 = vld [vmem:[#allocation11 + $0x270] sm:$0xff]
    %v397 = vld [vmem:[#allocation11 + $0x278] sm:$0xff]
    %v398 = vld [vmem:[#allocation11 + $0x280] sm:$0xff]
    %v399 = vld [vmem:[#allocation11 + $0x288] sm:$0xff]
    %v400 = vld [vmem:[#allocation11 + $0x290] sm:$0xff]
    %v401 = vld [vmem:[#allocation11 + $0x298] sm:$0xff]
    %v402 = vld [vmem:[#allocation11 + $0x2a0] sm:$0xff]
    %v403 = vld [vmem:[#allocation11 + $0x2a8] sm:$0xff]
    %v404 = vld [vmem:[#allocation11 + $0x2b0] sm:$0xff]
    %v405 = vld [vmem:[#allocation11 + $0x2b8] sm:$0xff]
    %v406 = vld [vmem:[#allocation11 + $0x2c0] sm:$0xff]
    %v407 = vld [vmem:[#allocation11 + $0x2c8] sm:$0xff]
    %v408 = vld [vmem:[#allocation11 + $0x2d0] sm:$0xff]
    %v409 = vld [vmem:[#allocation11 + $0x2d8] sm:$0xff]
    %v410 = vld [vmem:[#allocation11 + $0x2e0] sm:$0xff]
    %v411 = vld [vmem:[#allocation11 + $0x2e8] sm:$0xff]
    %v412 = vld [vmem:[#allocation11 + $0x2f0] sm:$0xff]
    %v413 = vld [vmem:[#allocation11 + $0x2f8] sm:$0xff]
    %v414 = vld [vmem:[#allocation11 + $0x300] sm:$0xff]
    %v415 = vld [vmem:[#allocation11 + $0x308] sm:$0xff]
    %v416 = vld [vmem:[#allocation11 + $0x310] sm:$0xff]
    %v417 = vld [vmem:[#allocation11 + $0x318] sm:$0xff]
    %v418 = vld [vmem:[#allocation11 + $0x320] sm:$0xff]
    %v419 = vld [vmem:[#allocation11 + $0x328] sm:$0xff]
    %v420 = vld [vmem:[#allocation11 + $0x330] sm:$0xff]
    %v421 = vld [vmem:[#allocation11 + $0x338] sm:$0xff]
    %v422 = vld [vmem:[#allocation11 + $0x340] sm:$0xff]
    %v423 = vld [vmem:[#allocation11 + $0x348] sm:$0xff]
    %v424 = vld [vmem:[#allocation11 + $0x350] sm:$0xff]
    %v425 = vld [vmem:[#allocation11 + $0x358] sm:$0xff]
    %v426 = vld [vmem:[#allocation11 + $0x360] sm:$0xff]
    %v427 = vld [vmem:[#allocation11 + $0x368] sm:$0xff]
    %v428 = vld [vmem:[#allocation11 + $0x370] sm:$0xff]
    %v429 = vld [vmem:[#allocation11 + $0x378] sm:$0xff]
    %v430 = vld [vmem:[#allocation11 + $0x380] sm:$0xff]
    %v431 = vld [vmem:[#allocation11 + $0x388] sm:$0xff]
    %v432 = vld [vmem:[#allocation11 + $0x390] sm:$0xff]
    %v433 = vld [vmem:[#allocation11 + $0x398] sm:$0xff]
    %v434 = vld [vmem:[#allocation11 + $0x3a0] sm:$0xff]
    %v435 = vld [vmem:[#allocation11 + $0x3a8] sm:$0xff]
    %v436 = vld [vmem:[#allocation11 + $0x3b0] sm:$0xff]
    %v437 = vld [vmem:[#allocation11 + $0x3b8] sm:$0xff]
    %v438 = vld [vmem:[#allocation11 + $0x3c0] sm:$0xff]
    %v439 = vld [vmem:[#allocation11 + $0x3c8] sm:$0xff]
    %v440 = vld [vmem:[#allocation11 + $0x3d0] sm:$0xff]
    %v441 = vld [vmem:[#allocation11 + $0x3d8] sm:$0xff]
    %v442 = vld [vmem:[#allocation11 + $0x3e0] sm:$0xff]
    %v443 = vld [vmem:[#allocation11 + $0x3e8] sm:$0xff]
    %v444 = vld [vmem:[#allocation11 + $0x3f0] sm:$0xff]
    %v445 = vld [vmem:[#allocation11 + $0x3f8] sm:$0xff]
    %v446 = vunpack.c.l.bf16 %v318
    %v447 = vunpack.c.h.bf16 %v318
    %v448 = vunpack.c.l.bf16 %v319
    %v449 = vunpack.c.h.bf16 %v319
    %v450 = vunpack.c.l.bf16 %v320
    %v451 = vunpack.c.h.bf16 %v320
    %v452 = vunpack.c.l.bf16 %v321
    %v453 = vunpack.c.h.bf16 %v321
    %v454 = vunpack.c.l.bf16 %v322
    %v455 = vunpack.c.h.bf16 %v322
    %v456 = vunpack.c.l.bf16 %v323
    %v457 = vunpack.c.h.bf16 %v323
    %v458 = vunpack.c.l.bf16 %v324
    %v459 = vunpack.c.h.bf16 %v324
    %v460 = vunpack.c.l.bf16 %v325
    %v461 = vunpack.c.h.bf16 %v325
    %v462 = vunpack.c.l.bf16 %v326
    %v463 = vunpack.c.h.bf16 %v326
    %v464 = vunpack.c.l.bf16 %v327
    %v465 = vunpack.c.h.bf16 %v327
    %v466 = vunpack.c.l.bf16 %v328
    %v467 = vunpack.c.h.bf16 %v328
    %v468 = vunpack.c.l.bf16 %v329
    %v469 = vunpack.c.h.bf16 %v329
    %v470 = vunpack.c.l.bf16 %v330
    %v471 = vunpack.c.h.bf16 %v330
    %v472 = vunpack.c.l.bf16 %v331
    %v473 = vunpack.c.h.bf16 %v331
    %v474 = vunpack.c.l.bf16 %v332
    %v475 = vunpack.c.h.bf16 %v332
    %v476 = vunpack.c.l.bf16 %v333
    %v477 = vunpack.c.h.bf16 %v333
    %v478 = vunpack.c.l.bf16 %v334
    %v479 = vunpack.c.h.bf16 %v334
    %v480 = vunpack.c.l.bf16 %v335
    %v481 = vunpack.c.h.bf16 %v335
    %v482 = vunpack.c.l.bf16 %v336
    %v483 = vunpack.c.h.bf16 %v336
    %v484 = vunpack.c.l.bf16 %v337
    %v485 = vunpack.c.h.bf16 %v337
    %v486 = vunpack.c.l.bf16 %v338
    %v487 = vunpack.c.h.bf16 %v338
    %v488 = vunpack.c.l.bf16 %v339
    %v489 = vunpack.c.h.bf16 %v339
    %v490 = vunpack.c.l.bf16 %v340
    %v491 = vunpack.c.h.bf16 %v340
    %v492 = vunpack.c.l.bf16 %v341
    %v493 = vunpack.c.h.bf16 %v341
    %v494 = vunpack.c.l.bf16 %v342
    %v495 = vunpack.c.h.bf16 %v342
    %v496 = vunpack.c.l.bf16 %v343
    %v497 = vunpack.c.h.bf16 %v343
    %v498 = vunpack.c.l.bf16 %v344
    %v499 = vunpack.c.h.bf16 %v344
    %v500 = vunpack.c.l.bf16 %v345
    %v501 = vunpack.c.h.bf16 %v345
    %v502 = vunpack.c.l.bf16 %v346
    %v503 = vunpack.c.h.bf16 %v346
    %v504 = vunpack.c.l.bf16 %v347
    %v505 = vunpack.c.h.bf16 %v347
    %v506 = vunpack.c.l.bf16 %v348
    %v507 = vunpack.c.h.bf16 %v348
    %v508 = vunpack.c.l.bf16 %v349
    %v509 = vunpack.c.h.bf16 %v349
    %v510 = vunpack.c.l.bf16 %v350
    %v511 = vunpack.c.h.bf16 %v350
    %v512 = vunpack.c.l.bf16 %v351
    %v513 = vunpack.c.h.bf16 %v351
    %v514 = vunpack.c.l.bf16 %v352
    %v515 = vunpack.c.h.bf16 %v352
    %v516 = vunpack.c.l.bf16 %v353
    %v517 = vunpack.c.h.bf16 %v353
    %v518 = vunpack.c.l.bf16 %v354
    %v519 = vunpack.c.h.bf16 %v354
    %v520 = vunpack.c.l.bf16 %v355
    %v521 = vunpack.c.h.bf16 %v355
    %v522 = vunpack.c.l.bf16 %v356
    %v523 = vunpack.c.h.bf16 %v356
    %v524 = vunpack.c.l.bf16 %v357
    %v525 = vunpack.c.h.bf16 %v357
    %v526 = vunpack.c.l.bf16 %v358
    %v527 = vunpack.c.h.bf16 %v358
    %v528 = vunpack.c.l.bf16 %v359
    %v529 = vunpack.c.h.bf16 %v359
    %v530 = vunpack.c.l.bf16 %v360
    %v531 = vunpack.c.h.bf16 %v360
    %v532 = vunpack.c.l.bf16 %v361
    %v533 = vunpack.c.h.bf16 %v361
    %v534 = vunpack.c.l.bf16 %v362
    %v535 = vunpack.c.h.bf16 %v362
    %v536 = vunpack.c.l.bf16 %v363
    %v537 = vunpack.c.h.bf16 %v363
    %v538 = vunpack.c.l.bf16 %v364
    %v539 = vunpack.c.h.bf16 %v364
    %v540 = vunpack.c.l.bf16 %v365
    %v541 = vunpack.c.h.bf16 %v365
    %v542 = vunpack.c.l.bf16 %v366
    %v543 = vunpack.c.h.bf16 %v366
    %v544 = vunpack.c.l.bf16 %v367
    %v545 = vunpack.c.h.bf16 %v367
    %v546 = vunpack.c.l.bf16 %v368
    %v547 = vunpack.c.h.bf16 %v368
    %v548 = vunpack.c.l.bf16 %v369
    %v549 = vunpack.c.h.bf16 %v369
    %v550 = vunpack.c.l.bf16 %v370
    %v551 = vunpack.c.h.bf16 %v370
    %v552 = vunpack.c.l.bf16 %v371
    %v553 = vunpack.c.h.bf16 %v371
    %v554 = vunpack.c.l.bf16 %v372
    %v555 = vunpack.c.h.bf16 %v372
    %v556 = vunpack.c.l.bf16 %v373
    %v557 = vunpack.c.h.bf16 %v373
    %v558 = vunpack.c.l.bf16 %v374
    %v559 = vunpack.c.h.bf16 %v374
    %v560 = vunpack.c.l.bf16 %v375
    %v561 = vunpack.c.h.bf16 %v375
    %v562 = vunpack.c.l.bf16 %v376
    %v563 = vunpack.c.h.bf16 %v376
    %v564 = vunpack.c.l.bf16 %v377
    %v565 = vunpack.c.h.bf16 %v377
    %v566 = vunpack.c.l.bf16 %v378
    %v567 = vunpack.c.h.bf16 %v378
    %v568 = vunpack.c.l.bf16 %v379
    %v569 = vunpack.c.h.bf16 %v379
    %v570 = vunpack.c.l.bf16 %v380
    %v571 = vunpack.c.h.bf16 %v380
    %v572 = vunpack.c.l.bf16 %v381
    %v573 = vunpack.c.h.bf16 %v381
    %v574 = vunpack.c.l.bf16 %v382
    %v575 = vunpack.c.h.bf16 %v382
    %v576 = vunpack.c.l.bf16 %v383
    %v577 = vunpack.c.h.bf16 %v383
    %v578 = vunpack.c.l.bf16 %v384
    %v579 = vunpack.c.h.bf16 %v384
    %v580 = vunpack.c.l.bf16 %v385
    %v581 = vunpack.c.h.bf16 %v385
    %v582 = vunpack.c.l.bf16 %v386
    %v583 = vunpack.c.h.bf16 %v386
    %v584 = vunpack.c.l.bf16 %v387
    %v585 = vunpack.c.h.bf16 %v387
    %v586 = vunpack.c.l.bf16 %v388
    %v587 = vunpack.c.h.bf16 %v388
    %v588 = vunpack.c.l.bf16 %v389
    %v589 = vunpack.c.h.bf16 %v389
    %v590 = vunpack.c.l.bf16 %v390
    %v591 = vunpack.c.h.bf16 %v390
    %v592 = vunpack.c.l.bf16 %v391
    %v593 = vunpack.c.h.bf16 %v391
    %v594 = vunpack.c.l.bf16 %v392
    %v595 = vunpack.c.h.bf16 %v392
    %v596 = vunpack.c.l.bf16 %v393
    %v597 = vunpack.c.h.bf16 %v393
    %v598 = vunpack.c.l.bf16 %v394
    %v599 = vunpack.c.h.bf16 %v394
    %v600 = vunpack.c.l.bf16 %v395
    %v601 = vunpack.c.h.bf16 %v395
    %v602 = vunpack.c.l.bf16 %v396
    %v603 = vunpack.c.h.bf16 %v396
    %v604 = vunpack.c.l.bf16 %v397
    %v605 = vunpack.c.h.bf16 %v397
    %v606 = vunpack.c.l.bf16 %v398
    %v607 = vunpack.c.h.bf16 %v398
    %v608 = vunpack.c.l.bf16 %v399
    %v609 = vunpack.c.h.bf16 %v399
    %v610 = vunpack.c.l.bf16 %v400
    %v611 = vunpack.c.h.bf16 %v400
    %v612 = vunpack.c.l.bf16 %v401
    %v613 = vunpack.c.h.bf16 %v401
    %v614 = vunpack.c.l.bf16 %v402
    %v615 = vunpack.c.h.bf16 %v402
    %v616 = vunpack.c.l.bf16 %v403
    %v617 = vunpack.c.h.bf16 %v403
    %v618 = vunpack.c.l.bf16 %v404
    %v619 = vunpack.c.h.bf16 %v404
    %v620 = vunpack.c.l.bf16 %v405
    %v621 = vunpack.c.h.bf16 %v405
    %v622 = vunpack.c.l.bf16 %v406
    %v623 = vunpack.c.h.bf16 %v406
    %v624 = vunpack.c.l.bf16 %v407
    %v625 = vunpack.c.h.bf16 %v407
    %v626 = vunpack.c.l.bf16 %v408
    %v627 = vunpack.c.h.bf16 %v408
    %v628 = vunpack.c.l.bf16 %v409
    %v629 = vunpack.c.h.bf16 %v409
    %v630 = vunpack.c.l.bf16 %v410
    %v631 = vunpack.c.h.bf16 %v410
    %v632 = vunpack.c.l.bf16 %v411
    %v633 = vunpack.c.h.bf16 %v411
    %v634 = vunpack.c.l.bf16 %v412
    %v635 = vunpack.c.h.bf16 %v412
    %v636 = vunpack.c.l.bf16 %v413
    %v637 = vunpack.c.h.bf16 %v413
    %v638 = vunpack.c.l.bf16 %v414
    %v639 = vunpack.c.h.bf16 %v414
    %v640 = vunpack.c.l.bf16 %v415
    %v641 = vunpack.c.h.bf16 %v415
    %v642 = vunpack.c.l.bf16 %v416
    %v643 = vunpack.c.h.bf16 %v416
    %v644 = vunpack.c.l.bf16 %v417
    %v645 = vunpack.c.h.bf16 %v417
    %v646 = vunpack.c.l.bf16 %v418
    %v647 = vunpack.c.h.bf16 %v418
    %v648 = vunpack.c.l.bf16 %v419
    %v649 = vunpack.c.h.bf16 %v419
    %v650 = vunpack.c.l.bf16 %v420
    %v651 = vunpack.c.h.bf16 %v420
    %v652 = vunpack.c.l.bf16 %v421
    %v653 = vunpack.c.h.bf16 %v421
    %v654 = vunpack.c.l.bf16 %v422
    %v655 = vunpack.c.h.bf16 %v422
    %v656 = vunpack.c.l.bf16 %v423
    %v657 = vunpack.c.h.bf16 %v423
    %v658 = vunpack.c.l.bf16 %v424
    %v659 = vunpack.c.h.bf16 %v424
    %v660 = vunpack.c.l.bf16 %v425
    %v661 = vunpack.c.h.bf16 %v425
    %v662 = vunpack.c.l.bf16 %v426
    %v663 = vunpack.c.h.bf16 %v426
    %v664 = vunpack.c.l.bf16 %v427
    %v665 = vunpack.c.h.bf16 %v427
    %v666 = vunpack.c.l.bf16 %v428
    %v667 = vunpack.c.h.bf16 %v428
    %v668 = vunpack.c.l.bf16 %v429
    %v669 = vunpack.c.h.bf16 %v429
    %v670 = vunpack.c.l.bf16 %v430
    %v671 = vunpack.c.h.bf16 %v430
    %v672 = vunpack.c.l.bf16 %v431
    %v673 = vunpack.c.h.bf16 %v431
    %v674 = vunpack.c.l.bf16 %v432
    %v675 = vunpack.c.h.bf16 %v432
    %v676 = vunpack.c.l.bf16 %v433
    %v677 = vunpack.c.h.bf16 %v433
    %v678 = vunpack.c.l.bf16 %v434
    %v679 = vunpack.c.h.bf16 %v434
    %v680 = vunpack.c.l.bf16 %v435
    %v681 = vunpack.c.h.bf16 %v435
    %v682 = vunpack.c.l.bf16 %v436
    %v683 = vunpack.c.h.bf16 %v436
    %v684 = vunpack.c.l.bf16 %v437
    %v685 = vunpack.c.h.bf16 %v437
    %v686 = vunpack.c.l.bf16 %v438
    %v687 = vunpack.c.h.bf16 %v438
    %v688 = vunpack.c.l.bf16 %v439
    %v689 = vunpack.c.h.bf16 %v439
    %v690 = vunpack.c.l.bf16 %v440
    %v691 = vunpack.c.h.bf16 %v440
    %v692 = vunpack.c.l.bf16 %v441
    %v693 = vunpack.c.h.bf16 %v441
    %v694 = vunpack.c.l.bf16 %v442
    %v695 = vunpack.c.h.bf16 %v442
    %v696 = vunpack.c.l.bf16 %v443
    %v697 = vunpack.c.h.bf16 %v443
    %v698 = vunpack.c.l.bf16 %v444
    %v699 = vunpack.c.h.bf16 %v444
    %v700 = vunpack.c.l.bf16 %v445
    %v701 = vunpack.c.h.bf16 %v445
    %v702 = vld [vmem:[#allocation14] sm:$0xff]
    %v703 = vld [vmem:[#allocation14 + $0x8] sm:$0xff]
    %v704 = vld [vmem:[#allocation14 + $0x10] sm:$0xff]
    %v705 = vld [vmem:[#allocation14 + $0x18] sm:$0xff]
    %v706 = vld [vmem:[#allocation14 + $0x20] sm:$0xff]
    %v707 = vld [vmem:[#allocation14 + $0x28] sm:$0xff]
    %v708 = vld [vmem:[#allocation14 + $0x30] sm:$0xff]
    %v709 = vld [vmem:[#allocation14 + $0x38] sm:$0xff]
    %v710 = vld [vmem:[#allocation14 + $0x40] sm:$0xff]
    %v711 = vld [vmem:[#allocation14 + $0x48] sm:$0xff]
    %v712 = vld [vmem:[#allocation14 + $0x50] sm:$0xff]
    %v713 = vld [vmem:[#allocation14 + $0x58] sm:$0xff]
    %v714 = vld [vmem:[#allocation14 + $0x60] sm:$0xff]
    %v715 = vld [vmem:[#allocation14 + $0x68] sm:$0xff]
    %v716 = vld [vmem:[#allocation14 + $0x70] sm:$0xff]
    %v717 = vld [vmem:[#allocation14 + $0x78] sm:$0xff]
    %v718 = vld [vmem:[#allocation14 + $0x80] sm:$0xff]
    %v719 = vld [vmem:[#allocation14 + $0x88] sm:$0xff]
    %v720 = vld [vmem:[#allocation14 + $0x90] sm:$0xff]
    %v721 = vld [vmem:[#allocation14 + $0x98] sm:$0xff]
    %v722 = vld [vmem:[#allocation14 + $0xa0] sm:$0xff]
    %v723 = vld [vmem:[#allocation14 + $0xa8] sm:$0xff]
    %v724 = vld [vmem:[#allocation14 + $0xb0] sm:$0xff]
    %v725 = vld [vmem:[#allocation14 + $0xb8] sm:$0xff]
    %v726 = vld [vmem:[#allocation14 + $0xc0] sm:$0xff]
    %v727 = vld [vmem:[#allocation14 + $0xc8] sm:$0xff]
    %v728 = vld [vmem:[#allocation14 + $0xd0] sm:$0xff]
    %v729 = vld [vmem:[#allocation14 + $0xd8] sm:$0xff]
    %v730 = vld [vmem:[#allocation14 + $0xe0] sm:$0xff]
    %v731 = vld [vmem:[#allocation14 + $0xe8] sm:$0xff]
    %v732 = vld [vmem:[#allocation14 + $0xf0] sm:$0xff]
    %v733 = vld [vmem:[#allocation14 + $0xf8] sm:$0xff]
    %v734 = vld [vmem:[#allocation14 + $0x100] sm:$0xff]
    %v735 = vld [vmem:[#allocation14 + $0x108] sm:$0xff]
    %v736 = vld [vmem:[#allocation14 + $0x110] sm:$0xff]
    %v737 = vld [vmem:[#allocation14 + $0x118] sm:$0xff]
    %v738 = vld [vmem:[#allocation14 + $0x120] sm:$0xff]
    %v739 = vld [vmem:[#allocation14 + $0x128] sm:$0xff]
    %v740 = vld [vmem:[#allocation14 + $0x130] sm:$0xff]
    %v741 = vld [vmem:[#allocation14 + $0x138] sm:$0xff]
    %v742 = vld [vmem:[#allocation14 + $0x140] sm:$0xff]
    %v743 = vld [vmem:[#allocation14 + $0x148] sm:$0xff]
    %v744 = vld [vmem:[#allocation14 + $0x150] sm:$0xff]
    %v745 = vld [vmem:[#allocation14 + $0x158] sm:$0xff]
    %v746 = vld [vmem:[#allocation14 + $0x160] sm:$0xff]
    %v747 = vld [vmem:[#allocation14 + $0x168] sm:$0xff]
    %v748 = vld [vmem:[#allocation14 + $0x170] sm:$0xff]
    %v749 = vld [vmem:[#allocation14 + $0x178] sm:$0xff]
    %v750 = vld [vmem:[#allocation14 + $0x180] sm:$0xff]
    %v751 = vld [vmem:[#allocation14 + $0x188] sm:$0xff]
    %v752 = vld [vmem:[#allocation14 + $0x190] sm:$0xff]
    %v753 = vld [vmem:[#allocation14 + $0x198] sm:$0xff]
    %v754 = vld [vmem:[#allocation14 + $0x1a0] sm:$0xff]
    %v755 = vld [vmem:[#allocation14 + $0x1a8] sm:$0xff]
    %v756 = vld [vmem:[#allocation14 + $0x1b0] sm:$0xff]
    %v757 = vld [vmem:[#allocation14 + $0x1b8] sm:$0xff]
    %v758 = vld [vmem:[#allocation14 + $0x1c0] sm:$0xff]
    %v759 = vld [vmem:[#allocation14 + $0x1c8] sm:$0xff]
    %v760 = vld [vmem:[#allocation14 + $0x1d0] sm:$0xff]
    %v761 = vld [vmem:[#allocation14 + $0x1d8] sm:$0xff]
    %v762 = vld [vmem:[#allocation14 + $0x1e0] sm:$0xff]
    %v763 = vld [vmem:[#allocation14 + $0x1e8] sm:$0xff]
    %v764 = vld [vmem:[#allocation14 + $0x1f0] sm:$0xff]
    %v765 = vld [vmem:[#allocation14 + $0x1f8] sm:$0xff]
    %v766 = vld [vmem:[#allocation14 + $0x200] sm:$0xff]
    %v767 = vld [vmem:[#allocation14 + $0x208] sm:$0xff]
    %v768 = vld [vmem:[#allocation14 + $0x210] sm:$0xff]
    %v769 = vld [vmem:[#allocation14 + $0x218] sm:$0xff]
    %v770 = vld [vmem:[#allocation14 + $0x220] sm:$0xff]
    %v771 = vld [vmem:[#allocation14 + $0x228] sm:$0xff]
    %v772 = vld [vmem:[#allocation14 + $0x230] sm:$0xff]
    %v773 = vld [vmem:[#allocation14 + $0x238] sm:$0xff]
    %v774 = vld [vmem:[#allocation14 + $0x240] sm:$0xff]
    %v775 = vld [vmem:[#allocation14 + $0x248] sm:$0xff]
    %v776 = vld [vmem:[#allocation14 + $0x250] sm:$0xff]
    %v777 = vld [vmem:[#allocation14 + $0x258] sm:$0xff]
    %v778 = vld [vmem:[#allocation14 + $0x260] sm:$0xff]
    %v779 = vld [vmem:[#allocation14 + $0x268] sm:$0xff]
    %v780 = vld [vmem:[#allocation14 + $0x270] sm:$0xff]
    %v781 = vld [vmem:[#allocation14 + $0x278] sm:$0xff]
    %v782 = vld [vmem:[#allocation14 + $0x280] sm:$0xff]
    %v783 = vld [vmem:[#allocation14 + $0x288] sm:$0xff]
    %v784 = vld [vmem:[#allocation14 + $0x290] sm:$0xff]
    %v785 = vld [vmem:[#allocation14 + $0x298] sm:$0xff]
    %v786 = vld [vmem:[#allocation14 + $0x2a0] sm:$0xff]
    %v787 = vld [vmem:[#allocation14 + $0x2a8] sm:$0xff]
    %v788 = vld [vmem:[#allocation14 + $0x2b0] sm:$0xff]
    %v789 = vld [vmem:[#allocation14 + $0x2b8] sm:$0xff]
    %v790 = vld [vmem:[#allocation14 + $0x2c0] sm:$0xff]
    %v791 = vld [vmem:[#allocation14 + $0x2c8] sm:$0xff]
    %v792 = vld [vmem:[#allocation14 + $0x2d0] sm:$0xff]
    %v793 = vld [vmem:[#allocation14 + $0x2d8] sm:$0xff]
    %v794 = vld [vmem:[#allocation14 + $0x2e0] sm:$0xff]
    %v795 = vld [vmem:[#allocation14 + $0x2e8] sm:$0xff]
    %v796 = vld [vmem:[#allocation14 + $0x2f0] sm:$0xff]
    %v797 = vld [vmem:[#allocation14 + $0x2f8] sm:$0xff]
    %v798 = vld [vmem:[#allocation14 + $0x300] sm:$0xff]
    %v799 = vld [vmem:[#allocation14 + $0x308] sm:$0xff]
    %v800 = vld [vmem:[#allocation14 + $0x310] sm:$0xff]
    %v801 = vld [vmem:[#allocation14 + $0x318] sm:$0xff]
    %v802 = vld [vmem:[#allocation14 + $0x320] sm:$0xff]
    %v803 = vld [vmem:[#allocation14 + $0x328] sm:$0xff]
    %v804 = vld [vmem:[#allocation14 + $0x330] sm:$0xff]
    %v805 = vld [vmem:[#allocation14 + $0x338] sm:$0xff]
    %v806 = vld [vmem:[#allocation14 + $0x340] sm:$0xff]
    %v807 = vld [vmem:[#allocation14 + $0x348] sm:$0xff]
    %v808 = vld [vmem:[#allocation14 + $0x350] sm:$0xff]
    %v809 = vld [vmem:[#allocation14 + $0x358] sm:$0xff]
    %v810 = vld [vmem:[#allocation14 + $0x360] sm:$0xff]
    %v811 = vld [vmem:[#allocation14 + $0x368] sm:$0xff]
    %v812 = vld [vmem:[#allocation14 + $0x370] sm:$0xff]
    %v813 = vld [vmem:[#allocation14 + $0x378] sm:$0xff]
    %v814 = vld [vmem:[#allocation14 + $0x380] sm:$0xff]
    %v815 = vld [vmem:[#allocation14 + $0x388] sm:$0xff]
    %v816 = vld [vmem:[#allocation14 + $0x390] sm:$0xff]
    %v817 = vld [vmem:[#allocation14 + $0x398] sm:$0xff]
    %v818 = vld [vmem:[#allocation14 + $0x3a0] sm:$0xff]
    %v819 = vld [vmem:[#allocation14 + $0x3a8] sm:$0xff]
    %v820 = vld [vmem:[#allocation14 + $0x3b0] sm:$0xff]
    %v821 = vld [vmem:[#allocation14 + $0x3b8] sm:$0xff]
    %v822 = vld [vmem:[#allocation14 + $0x3c0] sm:$0xff]
    %v823 = vld [vmem:[#allocation14 + $0x3c8] sm:$0xff]
    %v824 = vld [vmem:[#allocation14 + $0x3d0] sm:$0xff]
    %v825 = vld [vmem:[#allocation14 + $0x3d8] sm:$0xff]
    %v826 = vld [vmem:[#allocation14 + $0x3e0] sm:$0xff]
    %v827 = vld [vmem:[#allocation14 + $0x3e8] sm:$0xff]
    %v828 = vld [vmem:[#allocation14 + $0x3f0] sm:$0xff]
    %v829 = vld [vmem:[#allocation14 + $0x3f8] sm:$0xff]
    %v830 = vunpack.c.l.bf16 %v702
    %v831 = vunpack.c.h.bf16 %v702
    %v832 = vunpack.c.l.bf16 %v703
    %v833 = vunpack.c.h.bf16 %v703
    %v834 = vunpack.c.l.bf16 %v704
    %v835 = vunpack.c.h.bf16 %v704
    %v836 = vunpack.c.l.bf16 %v705
    %v837 = vunpack.c.h.bf16 %v705
    %v838 = vunpack.c.l.bf16 %v706
    %v839 = vunpack.c.h.bf16 %v706
    %v840 = vunpack.c.l.bf16 %v707
    %v841 = vunpack.c.h.bf16 %v707
    %v842 = vunpack.c.l.bf16 %v708
    %v843 = vunpack.c.h.bf16 %v708
    %v844 = vunpack.c.l.bf16 %v709
    %v845 = vunpack.c.h.bf16 %v709
    %v846 = vunpack.c.l.bf16 %v710
    %v847 = vunpack.c.h.bf16 %v710
    %v848 = vunpack.c.l.bf16 %v711
    %v849 = vunpack.c.h.bf16 %v711
    %v850 = vunpack.c.l.bf16 %v712
    %v851 = vunpack.c.h.bf16 %v712
    %v852 = vunpack.c.l.bf16 %v713
    %v853 = vunpack.c.h.bf16 %v713
    %v854 = vunpack.c.l.bf16 %v714
    %v855 = vunpack.c.h.bf16 %v714
    %v856 = vunpack.c.l.bf16 %v715
    %v857 = vunpack.c.h.bf16 %v715
    %v858 = vunpack.c.l.bf16 %v716
    %v859 = vunpack.c.h.bf16 %v716
    %v860 = vunpack.c.l.bf16 %v717
    %v861 = vunpack.c.h.bf16 %v717
    %v862 = vunpack.c.l.bf16 %v718
    %v863 = vunpack.c.h.bf16 %v718
    %v864 = vunpack.c.l.bf16 %v719
    %v865 = vunpack.c.h.bf16 %v719
    %v866 = vunpack.c.l.bf16 %v720
    %v867 = vunpack.c.h.bf16 %v720
    %v868 = vunpack.c.l.bf16 %v721
    %v869 = vunpack.c.h.bf16 %v721
    %v870 = vunpack.c.l.bf16 %v722
    %v871 = vunpack.c.h.bf16 %v722
    %v872 = vunpack.c.l.bf16 %v723
    %v873 = vunpack.c.h.bf16 %v723
    %v874 = vunpack.c.l.bf16 %v724
    %v875 = vunpack.c.h.bf16 %v724
    %v876 = vunpack.c.l.bf16 %v725
    %v877 = vunpack.c.h.bf16 %v725
    %v878 = vunpack.c.l.bf16 %v726
    %v879 = vunpack.c.h.bf16 %v726
    %v880 = vunpack.c.l.bf16 %v727
    %v881 = vunpack.c.h.bf16 %v727
    %v882 = vunpack.c.l.bf16 %v728
    %v883 = vunpack.c.h.bf16 %v728
    %v884 = vunpack.c.l.bf16 %v729
    %v885 = vunpack.c.h.bf16 %v729
    %v886 = vunpack.c.l.bf16 %v730
    %v887 = vunpack.c.h.bf16 %v730
    %v888 = vunpack.c.l.bf16 %v731
    %v889 = vunpack.c.h.bf16 %v731
    %v890 = vunpack.c.l.bf16 %v732
    %v891 = vunpack.c.h.bf16 %v732
    %v892 = vunpack.c.l.bf16 %v733
    %v893 = vunpack.c.h.bf16 %v733
    %v894 = vunpack.c.l.bf16 %v734
    %v895 = vunpack.c.h.bf16 %v734
    %v896 = vunpack.c.l.bf16 %v735
    %v897 = vunpack.c.h.bf16 %v735
    %v898 = vunpack.c.l.bf16 %v736
    %v899 = vunpack.c.h.bf16 %v736
    %v900 = vunpack.c.l.bf16 %v737
    %v901 = vunpack.c.h.bf16 %v737
    %v902 = vunpack.c.l.bf16 %v738
    %v903 = vunpack.c.h.bf16 %v738
    %v904 = vunpack.c.l.bf16 %v739
    %v905 = vunpack.c.h.bf16 %v739
    %v906 = vunpack.c.l.bf16 %v740
    %v907 = vunpack.c.h.bf16 %v740
    %v908 = vunpack.c.l.bf16 %v741
    %v909 = vunpack.c.h.bf16 %v741
    %v910 = vunpack.c.l.bf16 %v742
    %v911 = vunpack.c.h.bf16 %v742
    %v912 = vunpack.c.l.bf16 %v743
    %v913 = vunpack.c.h.bf16 %v743
    %v914 = vunpack.c.l.bf16 %v744
    %v915 = vunpack.c.h.bf16 %v744
    %v916 = vunpack.c.l.bf16 %v745
    %v917 = vunpack.c.h.bf16 %v745
    %v918 = vunpack.c.l.bf16 %v746
    %v919 = vunpack.c.h.bf16 %v746
    %v920 = vunpack.c.l.bf16 %v747
    %v921 = vunpack.c.h.bf16 %v747
    %v922 = vunpack.c.l.bf16 %v748
    %v923 = vunpack.c.h.bf16 %v748
    %v924 = vunpack.c.l.bf16 %v749
    %v925 = vunpack.c.h.bf16 %v749
    %v926 = vunpack.c.l.bf16 %v750
    %v927 = vunpack.c.h.bf16 %v750
    %v928 = vunpack.c.l.bf16 %v751
    %v929 = vunpack.c.h.bf16 %v751
    %v930 = vunpack.c.l.bf16 %v752
    %v931 = vunpack.c.h.bf16 %v752
    %v932 = vunpack.c.l.bf16 %v753
    %v933 = vunpack.c.h.bf16 %v753
    %v934 = vunpack.c.l.bf16 %v754
    %v935 = vunpack.c.h.bf16 %v754
    %v936 = vunpack.c.l.bf16 %v755
    %v937 = vunpack.c.h.bf16 %v755
    %v938 = vunpack.c.l.bf16 %v756
    %v939 = vunpack.c.h.bf16 %v756
    %v940 = vunpack.c.l.bf16 %v757
    %v941 = vunpack.c.h.bf16 %v757
    %v942 = vunpack.c.l.bf16 %v758
    %v943 = vunpack.c.h.bf16 %v758
    %v944 = vunpack.c.l.bf16 %v759
    %v945 = vunpack.c.h.bf16 %v759
    %v946 = vunpack.c.l.bf16 %v760
    %v947 = vunpack.c.h.bf16 %v760
    %v948 = vunpack.c.l.bf16 %v761
    %v949 = vunpack.c.h.bf16 %v761
    %v950 = vunpack.c.l.bf16 %v762
    %v951 = vunpack.c.h.bf16 %v762
    %v952 = vunpack.c.l.bf16 %v763
    %v953 = vunpack.c.h.bf16 %v763
    %v954 = vunpack.c.l.bf16 %v764
    %v955 = vunpack.c.h.bf16 %v764
    %v956 = vunpack.c.l.bf16 %v765
    %v957 = vunpack.c.h.bf16 %v765
    %v958 = vunpack.c.l.bf16 %v766
    %v959 = vunpack.c.h.bf16 %v766
    %v960 = vunpack.c.l.bf16 %v767
    %v961 = vunpack.c.h.bf16 %v767
    %v962 = vunpack.c.l.bf16 %v768
    %v963 = vunpack.c.h.bf16 %v768
    %v964 = vunpack.c.l.bf16 %v769
    %v965 = vunpack.c.h.bf16 %v769
    %v966 = vunpack.c.l.bf16 %v770
    %v967 = vunpack.c.h.bf16 %v770
    %v968 = vunpack.c.l.bf16 %v771
    %v969 = vunpack.c.h.bf16 %v771
    %v970 = vunpack.c.l.bf16 %v772
    %v971 = vunpack.c.h.bf16 %v772
    %v972 = vunpack.c.l.bf16 %v773
    %v973 = vunpack.c.h.bf16 %v773
    %v974 = vunpack.c.l.bf16 %v774
    %v975 = vunpack.c.h.bf16 %v774
    %v976 = vunpack.c.l.bf16 %v775
    %v977 = vunpack.c.h.bf16 %v775
    %v978 = vunpack.c.l.bf16 %v776
    %v979 = vunpack.c.h.bf16 %v776
    %v980 = vunpack.c.l.bf16 %v777
    %v981 = vunpack.c.h.bf16 %v777
    %v982 = vunpack.c.l.bf16 %v778
    %v983 = vunpack.c.h.bf16 %v778
    %v984 = vunpack.c.l.bf16 %v779
    %v985 = vunpack.c.h.bf16 %v779
    %v986 = vunpack.c.l.bf16 %v780
    %v987 = vunpack.c.h.bf16 %v780
    %v988 = vunpack.c.l.bf16 %v781
    %v989 = vunpack.c.h.bf16 %v781
    %v990 = vunpack.c.l.bf16 %v782
    %v991 = vunpack.c.h.bf16 %v782
    %v992 = vunpack.c.l.bf16 %v783
    %v993 = vunpack.c.h.bf16 %v783
    %v994 = vunpack.c.l.bf16 %v784
    %v995 = vunpack.c.h.bf16 %v784
    %v996 = vunpack.c.l.bf16 %v785
    %v997 = vunpack.c.h.bf16 %v785
    %v998 = vunpack.c.l.bf16 %v786
    %v999 = vunpack.c.h.bf16 %v786
    %v1000 = vunpack.c.l.bf16 %v787
    %v1001 = vunpack.c.h.bf16 %v787
    %v1002 = vunpack.c.l.bf16 %v788
    %v1003 = vunpack.c.h.bf16 %v788
    %v1004 = vunpack.c.l.bf16 %v789
    %v1005 = vunpack.c.h.bf16 %v789
    %v1006 = vunpack.c.l.bf16 %v790
    %v1007 = vunpack.c.h.bf16 %v790
    %v1008 = vunpack.c.l.bf16 %v791
    %v1009 = vunpack.c.h.bf16 %v791
    %v1010 = vunpack.c.l.bf16 %v792
    %v1011 = vunpack.c.h.bf16 %v792
    %v1012 = vunpack.c.l.bf16 %v793
    %v1013 = vunpack.c.h.bf16 %v793
    %v1014 = vunpack.c.l.bf16 %v794
    %v1015 = vunpack.c.h.bf16 %v794
    %v1016 = vunpack.c.l.bf16 %v795
    %v1017 = vunpack.c.h.bf16 %v795
    %v1018 = vunpack.c.l.bf16 %v796
    %v1019 = vunpack.c.h.bf16 %v796
    %v1020 = vunpack.c.l.bf16 %v797
    %v1021 = vunpack.c.h.bf16 %v797
    %v1022 = vunpack.c.l.bf16 %v798
    %v1023 = vunpack.c.h.bf16 %v798
    %v1024 = vunpack.c.l.bf16 %v799
    %v1025 = vunpack.c.h.bf16 %v799
    %v1026 = vunpack.c.l.bf16 %v800
    %v1027 = vunpack.c.h.bf16 %v800
    %v1028 = vunpack.c.l.bf16 %v801
    %v1029 = vunpack.c.h.bf16 %v801
    %v1030 = vunpack.c.l.bf16 %v802
    %v1031 = vunpack.c.h.bf16 %v802
    %v1032 = vunpack.c.l.bf16 %v803
    %v1033 = vunpack.c.h.bf16 %v803
    %v1034 = vunpack.c.l.bf16 %v804
    %v1035 = vunpack.c.h.bf16 %v804
    %v1036 = vunpack.c.l.bf16 %v805
    %v1037 = vunpack.c.h.bf16 %v805
    %v1038 = vunpack.c.l.bf16 %v806
    %v1039 = vunpack.c.h.bf16 %v806
    %v1040 = vunpack.c.l.bf16 %v807
    %v1041 = vunpack.c.h.bf16 %v807
    %v1042 = vunpack.c.l.bf16 %v808
    %v1043 = vunpack.c.h.bf16 %v808
    %v1044 = vunpack.c.l.bf16 %v809
    %v1045 = vunpack.c.h.bf16 %v809
    %v1046 = vunpack.c.l.bf16 %v810
    %v1047 = vunpack.c.h.bf16 %v810
    %v1048 = vunpack.c.l.bf16 %v811
    %v1049 = vunpack.c.h.bf16 %v811
    %v1050 = vunpack.c.l.bf16 %v812
    %v1051 = vunpack.c.h.bf16 %v812
    %v1052 = vunpack.c.l.bf16 %v813
    %v1053 = vunpack.c.h.bf16 %v813
    %v1054 = vunpack.c.l.bf16 %v814
    %v1055 = vunpack.c.h.bf16 %v814
    %v1056 = vunpack.c.l.bf16 %v815
    %v1057 = vunpack.c.h.bf16 %v815
    %v1058 = vunpack.c.l.bf16 %v816
    %v1059 = vunpack.c.h.bf16 %v816
    %v1060 = vunpack.c.l.bf16 %v817
    %v1061 = vunpack.c.h.bf16 %v817
    %v1062 = vunpack.c.l.bf16 %v818
    %v1063 = vunpack.c.h.bf16 %v818
    %v1064 = vunpack.c.l.bf16 %v819
    %v1065 = vunpack.c.h.bf16 %v819
    %v1066 = vunpack.c.l.bf16 %v820
    %v1067 = vunpack.c.h.bf16 %v820
    %v1068 = vunpack.c.l.bf16 %v821
    %v1069 = vunpack.c.h.bf16 %v821
    %v1070 = vunpack.c.l.bf16 %v822
    %v1071 = vunpack.c.h.bf16 %v822
    %v1072 = vunpack.c.l.bf16 %v823
    %v1073 = vunpack.c.h.bf16 %v823
    %v1074 = vunpack.c.l.bf16 %v824
    %v1075 = vunpack.c.h.bf16 %v824
    %v1076 = vunpack.c.l.bf16 %v825
    %v1077 = vunpack.c.h.bf16 %v825
    %v1078 = vunpack.c.l.bf16 %v826
    %v1079 = vunpack.c.h.bf16 %v826
    %v1080 = vunpack.c.l.bf16 %v827
    %v1081 = vunpack.c.h.bf16 %v827
    %v1082 = vunpack.c.l.bf16 %v828
    %v1083 = vunpack.c.h.bf16 %v828
    %v1084 = vunpack.c.l.bf16 %v829
    %v1085 = vunpack.c.h.bf16 %v829
    %v1086 = vstv %s193
    %v1087 = vmul.f32 %v1086, %v830
    %v1088 = vmul.f32 %v1086, %v831
    %v1089 = vmul.f32 %v1086, %v832
    %v1090 = vmul.f32 %v1086, %v833
    %v1091 = vmul.f32 %v1086, %v834
    %v1092 = vmul.f32 %v1086, %v835
    %v1093 = vmul.f32 %v1086, %v836
    %v1094 = vmul.f32 %v1086, %v837
    %v1095 = vmul.f32 %v1086, %v838
    %v1096 = vmul.f32 %v1086, %v839
    %v1097 = vmul.f32 %v1086, %v840
    %v1098 = vmul.f32 %v1086, %v841
    %v1099 = vmul.f32 %v1086, %v842
    %v1100 = vmul.f32 %v1086, %v843
    %v1101 = vmul.f32 %v1086, %v844
    %v1102 = vmul.f32 %v1086, %v845
    %v1103 = vmul.f32 %v1086, %v846
    %v1104 = vmul.f32 %v1086, %v847
    %v1105 = vmul.f32 %v1086, %v848
    %v1106 = vmul.f32 %v1086, %v849
    %v1107 = vmul.f32 %v1086, %v850
    %v1108 = vmul.f32 %v1086, %v851
    %v1109 = vmul.f32 %v1086, %v852
    %v1110 = vmul.f32 %v1086, %v853
    %v1111 = vmul.f32 %v1086, %v854
    %v1112 = vmul.f32 %v1086, %v855
    %v1113 = vmul.f32 %v1086, %v856
    %v1114 = vmul.f32 %v1086, %v857
    %v1115 = vmul.f32 %v1086, %v858
    %v1116 = vmul.f32 %v1086, %v859
    %v1117 = vmul.f32 %v1086, %v860
    %v1118 = vmul.f32 %v1086, %v861
    %v1119 = vmul.f32 %v1086, %v862
    %v1120 = vmul.f32 %v1086, %v863
    %v1121 = vmul.f32 %v1086, %v864
    %v1122 = vmul.f32 %v1086, %v865
    %v1123 = vmul.f32 %v1086, %v866
    %v1124 = vmul.f32 %v1086, %v867
    %v1125 = vmul.f32 %v1086, %v868
    %v1126 = vmul.f32 %v1086, %v869
    %v1127 = vmul.f32 %v1086, %v870
    %v1128 = vmul.f32 %v1086, %v871
    %v1129 = vmul.f32 %v1086, %v872
    %v1130 = vmul.f32 %v1086, %v873
    %v1131 = vmul.f32 %v1086, %v874
    %v1132 = vmul.f32 %v1086, %v875
    %v1133 = vmul.f32 %v1086, %v876
    %v1134 = vmul.f32 %v1086, %v877
    %v1135 = vmul.f32 %v1086, %v878
    %v1136 = vmul.f32 %v1086, %v879
    %v1137 = vmul.f32 %v1086, %v880
    %v1138 = vmul.f32 %v1086, %v881
    %v1139 = vmul.f32 %v1086, %v882
    %v1140 = vmul.f32 %v1086, %v883
    %v1141 = vmul.f32 %v1086, %v884
    %v1142 = vmul.f32 %v1086, %v885
    %v1143 = vmul.f32 %v1086, %v886
    %v1144 = vmul.f32 %v1086, %v887
    %v1145 = vmul.f32 %v1086, %v888
    %v1146 = vmul.f32 %v1086, %v889
    %v1147 = vmul.f32 %v1086, %v890
    %v1148 = vmul.f32 %v1086, %v891
    %v1149 = vmul.f32 %v1086, %v892
    %v1150 = vmul.f32 %v1086, %v893
    %v1151 = vmul.f32 %v1086, %v894
    %v1152 = vmul.f32 %v1086, %v895
    %v1153 = vmul.f32 %v1086, %v896
    %v1154 = vmul.f32 %v1086, %v897
    %v1155 = vmul.f32 %v1086, %v898
    %v1156 = vmul.f32 %v1086, %v899
    %v1157 = vmul.f32 %v1086, %v900
    %v1158 = vmul.f32 %v1086, %v901
    %v1159 = vmul.f32 %v1086, %v902
    %v1160 = vmul.f32 %v1086, %v903
    %v1161 = vmul.f32 %v1086, %v904
    %v1162 = vmul.f32 %v1086, %v905
    %v1163 = vmul.f32 %v1086, %v906
    %v1164 = vmul.f32 %v1086, %v907
    %v1165 = vmul.f32 %v1086, %v908
    %v1166 = vmul.f32 %v1086, %v909
    %v1167 = vmul.f32 %v1086, %v910
    %v1168 = vmul.f32 %v1086, %v911
    %v1169 = vmul.f32 %v1086, %v912
    %v1170 = vmul.f32 %v1086, %v913
    %v1171 = vmul.f32 %v1086, %v914
    %v1172 = vmul.f32 %v1086, %v915
    %v1173 = vmul.f32 %v1086, %v916
    %v1174 = vmul.f32 %v1086, %v917
    %v1175 = vmul.f32 %v1086, %v918
    %v1176 = vmul.f32 %v1086, %v919
    %v1177 = vmul.f32 %v1086, %v920
    %v1178 = vmul.f32 %v1086, %v921
    %v1179 = vmul.f32 %v1086, %v922
    %v1180 = vmul.f32 %v1086, %v923
    %v1181 = vmul.f32 %v1086, %v924
    %v1182 = vmul.f32 %v1086, %v925
    %v1183 = vmul.f32 %v1086, %v926
    %v1184 = vmul.f32 %v1086, %v927
    %v1185 = vmul.f32 %v1086, %v928
    %v1186 = vmul.f32 %v1086, %v929
    %v1187 = vmul.f32 %v1086, %v930
    %v1188 = vmul.f32 %v1086, %v931
    %v1189 = vmul.f32 %v1086, %v932
    %v1190 = vmul.f32 %v1086, %v933
    %v1191 = vmul.f32 %v1086, %v934
    %v1192 = vmul.f32 %v1086, %v935
    %v1193 = vmul.f32 %v1086, %v936
    %v1194 = vmul.f32 %v1086, %v937
    %v1195 = vmul.f32 %v1086, %v938
    %v1196 = vmul.f32 %v1086, %v939
    %v1197 = vmul.f32 %v1086, %v940
    %v1198 = vmul.f32 %v1086, %v941
    %v1199 = vmul.f32 %v1086, %v942
    %v1200 = vmul.f32 %v1086, %v943
    %v1201 = vmul.f32 %v1086, %v944
    %v1202 = vmul.f32 %v1086, %v945
    %v1203 = vmul.f32 %v1086, %v946
    %v1204 = vmul.f32 %v1086, %v947
    %v1205 = vmul.f32 %v1086, %v948
    %v1206 = vmul.f32 %v1086, %v949
    %v1207 = vmul.f32 %v1086, %v950
    %v1208 = vmul.f32 %v1086, %v951
    %v1209 = vmul.f32 %v1086, %v952
    %v1210 = vmul.f32 %v1086, %v953
    %v1211 = vmul.f32 %v1086, %v954
    %v1212 = vmul.f32 %v1086, %v955
    %v1213 = vmul.f32 %v1086, %v956
    %v1214 = vmul.f32 %v1086, %v957
    %v1215 = vmul.f32 %v1086, %v958
    %v1216 = vmul.f32 %v1086, %v959
    %v1217 = vmul.f32 %v1086, %v960
    %v1218 = vmul.f32 %v1086, %v961
    %v1219 = vmul.f32 %v1086, %v962
    %v1220 = vmul.f32 %v1086, %v963
    %v1221 = vmul.f32 %v1086, %v964
    %v1222 = vmul.f32 %v1086, %v965
    %v1223 = vmul.f32 %v1086, %v966
    %v1224 = vmul.f32 %v1086, %v967
    %v1225 = vmul.f32 %v1086, %v968
    %v1226 = vmul.f32 %v1086, %v969
    %v1227 = vmul.f32 %v1086, %v970
    %v1228 = vmul.f32 %v1086, %v971
    %v1229 = vmul.f32 %v1086, %v972
    %v1230 = vmul.f32 %v1086, %v973
    %v1231 = vmul.f32 %v1086, %v974
    %v1232 = vmul.f32 %v1086, %v975
    %v1233 = vmul.f32 %v1086, %v976
    %v1234 = vmul.f32 %v1086, %v977
    %v1235 = vmul.f32 %v1086, %v978
    %v1236 = vmul.f32 %v1086, %v979
    %v1237 = vmul.f32 %v1086, %v980
    %v1238 = vmul.f32 %v1086, %v981
    %v1239 = vmul.f32 %v1086, %v982
    %v1240 = vmul.f32 %v1086, %v983
    %v1241 = vmul.f32 %v1086, %v984
    %v1242 = vmul.f32 %v1086, %v985
    %v1243 = vmul.f32 %v1086, %v986
    %v1244 = vmul.f32 %v1086, %v987
    %v1245 = vmul.f32 %v1086, %v988
    %v1246 = vmul.f32 %v1086, %v989
    %v1247 = vmul.f32 %v1086, %v990
    %v1248 = vmul.f32 %v1086, %v991
    %v1249 = vmul.f32 %v1086, %v992
    %v1250 = vmul.f32 %v1086, %v993
    %v1251 = vmul.f32 %v1086, %v994
    %v1252 = vmul.f32 %v1086, %v995
    %v1253 = vmul.f32 %v1086, %v996
    %v1254 = vmul.f32 %v1086, %v997
    %v1255 = vmul.f32 %v1086, %v998
    %v1256 = vmul.f32 %v1086, %v999
    %v1257 = vmul.f32 %v1086, %v1000
    %v1258 = vmul.f32 %v1086, %v1001
    %v1259 = vmul.f32 %v1086, %v1002
    %v1260 = vmul.f32 %v1086, %v1003
    %v1261 = vmul.f32 %v1086, %v1004
    %v1262 = vmul.f32 %v1086, %v1005
    %v1263 = vmul.f32 %v1086, %v1006
    %v1264 = vmul.f32 %v1086, %v1007
    %v1265 = vmul.f32 %v1086, %v1008
    %v1266 = vmul.f32 %v1086, %v1009
    %v1267 = vmul.f32 %v1086, %v1010
    %v1268 = vmul.f32 %v1086, %v1011
    %v1269 = vmul.f32 %v1086, %v1012
    %v1270 = vmul.f32 %v1086, %v1013
    %v1271 = vmul.f32 %v1086, %v1014
    %v1272 = vmul.f32 %v1086, %v1015
    %v1273 = vmul.f32 %v1086, %v1016
    %v1274 = vmul.f32 %v1086, %v1017
    %v1275 = vmul.f32 %v1086, %v1018
    %v1276 = vmul.f32 %v1086, %v1019
    %v1277 = vmul.f32 %v1086, %v1020
    %v1278 = vmul.f32 %v1086, %v1021
    %v1279 = vmul.f32 %v1086, %v1022
    %v1280 = vmul.f32 %v1086, %v1023
    %v1281 = vmul.f32 %v1086, %v1024
    %v1282 = vmul.f32 %v1086, %v1025
    %v1283 = vmul.f32 %v1086, %v1026
    %v1284 = vmul.f32 %v1086, %v1027
    %v1285 = vmul.f32 %v1086, %v1028
    %v1286 = vmul.f32 %v1086, %v1029
    %v1287 = vmul.f32 %v1086, %v1030
    %v1288 = vmul.f32 %v1086, %v1031
    %v1289 = vmul.f32 %v1086, %v1032
    %v1290 = vmul.f32 %v1086, %v1033
    %v1291 = vmul.f32 %v1086, %v1034
    %v1292 = vmul.f32 %v1086, %v1035
    %v1293 = vmul.f32 %v1086, %v1036
    %v1294 = vmul.f32 %v1086, %v1037
    %v1295 = vmul.f32 %v1086, %v1038
    %v1296 = vmul.f32 %v1086, %v1039
    %v1297 = vmul.f32 %v1086, %v1040
    %v1298 = vmul.f32 %v1086, %v1041
    %v1299 = vmul.f32 %v1086, %v1042
    %v1300 = vmul.f32 %v1086, %v1043
    %v1301 = vmul.f32 %v1086, %v1044
    %v1302 = vmul.f32 %v1086, %v1045
    %v1303 = vmul.f32 %v1086, %v1046
    %v1304 = vmul.f32 %v1086, %v1047
    %v1305 = vmul.f32 %v1086, %v1048
    %v1306 = vmul.f32 %v1086, %v1049
    %v1307 = vmul.f32 %v1086, %v1050
    %v1308 = vmul.f32 %v1086, %v1051
    %v1309 = vmul.f32 %v1086, %v1052
    %v1310 = vmul.f32 %v1086, %v1053
    %v1311 = vmul.f32 %v1086, %v1054
    %v1312 = vmul.f32 %v1086, %v1055
    %v1313 = vmul.f32 %v1086, %v1056
    %v1314 = vmul.f32 %v1086, %v1057
    %v1315 = vmul.f32 %v1086, %v1058
    %v1316 = vmul.f32 %v1086, %v1059
    %v1317 = vmul.f32 %v1086, %v1060
    %v1318 = vmul.f32 %v1086, %v1061
    %v1319 = vmul.f32 %v1086, %v1062
    %v1320 = vmul.f32 %v1086, %v1063
    %v1321 = vmul.f32 %v1086, %v1064
    %v1322 = vmul.f32 %v1086, %v1065
    %v1323 = vmul.f32 %v1086, %v1066
    %v1324 = vmul.f32 %v1086, %v1067
    %v1325 = vmul.f32 %v1086, %v1068
    %v1326 = vmul.f32 %v1086, %v1069
    %v1327 = vmul.f32 %v1086, %v1070
    %v1328 = vmul.f32 %v1086, %v1071
    %v1329 = vmul.f32 %v1086, %v1072
    %v1330 = vmul.f32 %v1086, %v1073
    %v1331 = vmul.f32 %v1086, %v1074
    %v1332 = vmul.f32 %v1086, %v1075
    %v1333 = vmul.f32 %v1086, %v1076
    %v1334 = vmul.f32 %v1086, %v1077
    %v1335 = vmul.f32 %v1086, %v1078
    %v1336 = vmul.f32 %v1086, %v1079
    %v1337 = vmul.f32 %v1086, %v1080
    %v1338 = vmul.f32 %v1086, %v1081
    %v1339 = vmul.f32 %v1086, %v1082
    %v1340 = vmul.f32 %v1086, %v1083
    %v1341 = vmul.f32 %v1086, %v1084
    %v1342 = vmul.f32 %v1086, %v1085
    %v1343 = vadd.f32 %v446, %v1087
    %v1344 = vadd.f32 %v447, %v1088
    %v1345 = vadd.f32 %v448, %v1089
    %v1346 = vadd.f32 %v449, %v1090
    %v1347 = vadd.f32 %v450, %v1091
    %v1348 = vadd.f32 %v451, %v1092
    %v1349 = vadd.f32 %v452, %v1093
    %v1350 = vadd.f32 %v453, %v1094
    %v1351 = vadd.f32 %v454, %v1095
    %v1352 = vadd.f32 %v455, %v1096
    %v1353 = vadd.f32 %v456, %v1097
    %v1354 = vadd.f32 %v457, %v1098
    %v1355 = vadd.f32 %v458, %v1099
    %v1356 = vadd.f32 %v459, %v1100
    %v1357 = vadd.f32 %v460, %v1101
    %v1358 = vadd.f32 %v461, %v1102
    %v1359 = vadd.f32 %v462, %v1103
    %v1360 = vadd.f32 %v463, %v1104
    %v1361 = vadd.f32 %v464, %v1105
    %v1362 = vadd.f32 %v465, %v1106
    %v1363 = vadd.f32 %v466, %v1107
    %v1364 = vadd.f32 %v467, %v1108
    %v1365 = vadd.f32 %v468, %v1109
    %v1366 = vadd.f32 %v469, %v1110
    %v1367 = vadd.f32 %v470, %v1111
    %v1368 = vadd.f32 %v471, %v1112
    %v1369 = vadd.f32 %v472, %v1113
    %v1370 = vadd.f32 %v473, %v1114
    %v1371 = vadd.f32 %v474, %v1115
    %v1372 = vadd.f32 %v475, %v1116
    %v1373 = vadd.f32 %v476, %v1117
    %v1374 = vadd.f32 %v477, %v1118
    %v1375 = vadd.f32 %v478, %v1119
    %v1376 = vadd.f32 %v479, %v1120
    %v1377 = vadd.f32 %v480, %v1121
    %v1378 = vadd.f32 %v481, %v1122
    %v1379 = vadd.f32 %v482, %v1123
    %v1380 = vadd.f32 %v483, %v1124
    %v1381 = vadd.f32 %v484, %v1125
    %v1382 = vadd.f32 %v485, %v1126
    %v1383 = vadd.f32 %v486, %v1127
    %v1384 = vadd.f32 %v487, %v1128
    %v1385 = vadd.f32 %v488, %v1129
    %v1386 = vadd.f32 %v489, %v1130
    %v1387 = vadd.f32 %v490, %v1131
    %v1388 = vadd.f32 %v491, %v1132
    %v1389 = vadd.f32 %v492, %v1133
    %v1390 = vadd.f32 %v493, %v1134
    %v1391 = vadd.f32 %v494, %v1135
    %v1392 = vadd.f32 %v495, %v1136
    %v1393 = vadd.f32 %v496, %v1137
    %v1394 = vadd.f32 %v497, %v1138
    %v1395 = vadd.f32 %v498, %v1139
    %v1396 = vadd.f32 %v499, %v1140
    %v1397 = vadd.f32 %v500, %v1141
    %v1398 = vadd.f32 %v501, %v1142
    %v1399 = vadd.f32 %v502, %v1143
    %v1400 = vadd.f32 %v503, %v1144
    %v1401 = vadd.f32 %v504, %v1145
    %v1402 = vadd.f32 %v505, %v1146
    %v1403 = vadd.f32 %v506, %v1147
    %v1404 = vadd.f32 %v507, %v1148
    %v1405 = vadd.f32 %v508, %v1149
    %v1406 = vadd.f32 %v509, %v1150
    %v1407 = vadd.f32 %v510, %v1151
    %v1408 = vadd.f32 %v511, %v1152
    %v1409 = vadd.f32 %v512, %v1153
    %v1410 = vadd.f32 %v513, %v1154
    %v1411 = vadd.f32 %v514, %v1155
    %v1412 = vadd.f32 %v515, %v1156
    %v1413 = vadd.f32 %v516, %v1157
    %v1414 = vadd.f32 %v517, %v1158
    %v1415 = vadd.f32 %v518, %v1159
    %v1416 = vadd.f32 %v519, %v1160
    %v1417 = vadd.f32 %v520, %v1161
    %v1418 = vadd.f32 %v521, %v1162
    %v1419 = vadd.f32 %v522, %v1163
    %v1420 = vadd.f32 %v523, %v1164
    %v1421 = vadd.f32 %v524, %v1165
    %v1422 = vadd.f32 %v525, %v1166
    %v1423 = vadd.f32 %v526, %v1167
    %v1424 = vadd.f32 %v527, %v1168
    %v1425 = vadd.f32 %v528, %v1169
    %v1426 = vadd.f32 %v529, %v1170
    %v1427 = vadd.f32 %v530, %v1171
    %v1428 = vadd.f32 %v531, %v1172
    %v1429 = vadd.f32 %v532, %v1173
    %v1430 = vadd.f32 %v533, %v1174
    %v1431 = vadd.f32 %v534, %v1175
    %v1432 = vadd.f32 %v535, %v1176
    %v1433 = vadd.f32 %v536, %v1177
    %v1434 = vadd.f32 %v537, %v1178
    %v1435 = vadd.f32 %v538, %v1179
    %v1436 = vadd.f32 %v539, %v1180
    %v1437 = vadd.f32 %v540, %v1181
    %v1438 = vadd.f32 %v541, %v1182
    %v1439 = vadd.f32 %v542, %v1183
    %v1440 = vadd.f32 %v543, %v1184
    %v1441 = vadd.f32 %v544, %v1185
    %v1442 = vadd.f32 %v545, %v1186
    %v1443 = vadd.f32 %v546, %v1187
    %v1444 = vadd.f32 %v547, %v1188
    %v1445 = vadd.f32 %v548, %v1189
    %v1446 = vadd.f32 %v549, %v1190
    %v1447 = vadd.f32 %v550, %v1191
    %v1448 = vadd.f32 %v551, %v1192
    %v1449 = vadd.f32 %v552, %v1193
    %v1450 = vadd.f32 %v553, %v1194
    %v1451 = vadd.f32 %v554, %v1195
    %v1452 = vadd.f32 %v555, %v1196
    %v1453 = vadd.f32 %v556, %v1197
    %v1454 = vadd.f32 %v557, %v1198
    %v1455 = vadd.f32 %v558, %v1199
    %v1456 = vadd.f32 %v559, %v1200
    %v1457 = vadd.f32 %v560, %v1201
    %v1458 = vadd.f32 %v561, %v1202
    %v1459 = vadd.f32 %v562, %v1203
    %v1460 = vadd.f32 %v563, %v1204
    %v1461 = vadd.f32 %v564, %v1205
    %v1462 = vadd.f32 %v565, %v1206
    %v1463 = vadd.f32 %v566, %v1207
    %v1464 = vadd.f32 %v567, %v1208
    %v1465 = vadd.f32 %v568, %v1209
    %v1466 = vadd.f32 %v569, %v1210
    %v1467 = vadd.f32 %v570, %v1211
    %v1468 = vadd.f32 %v571, %v1212
    %v1469 = vadd.f32 %v572, %v1213
    %v1470 = vadd.f32 %v573, %v1214
    %v1471 = vadd.f32 %v574, %v1215
    %v1472 = vadd.f32 %v575, %v1216
    %v1473 = vadd.f32 %v576, %v1217
    %v1474 = vadd.f32 %v577, %v1218
    %v1475 = vadd.f32 %v578, %v1219
    %v1476 = vadd.f32 %v579, %v1220
    %v1477 = vadd.f32 %v580, %v1221
    %v1478 = vadd.f32 %v581, %v1222
    %v1479 = vadd.f32 %v582, %v1223
    %v1480 = vadd.f32 %v583, %v1224
    %v1481 = vadd.f32 %v584, %v1225
    %v1482 = vadd.f32 %v585, %v1226
    %v1483 = vadd.f32 %v586, %v1227
    %v1484 = vadd.f32 %v587, %v1228
    %v1485 = vadd.f32 %v588, %v1229
    %v1486 = vadd.f32 %v589, %v1230
    %v1487 = vadd.f32 %v590, %v1231
    %v1488 = vadd.f32 %v591, %v1232
    %v1489 = vadd.f32 %v592, %v1233
    %v1490 = vadd.f32 %v593, %v1234
    %v1491 = vadd.f32 %v594, %v1235
    %v1492 = vadd.f32 %v595, %v1236
    %v1493 = vadd.f32 %v596, %v1237
    %v1494 = vadd.f32 %v597, %v1238
    %v1495 = vadd.f32 %v598, %v1239
    %v1496 = vadd.f32 %v599, %v1240
    %v1497 = vadd.f32 %v600, %v1241
    %v1498 = vadd.f32 %v601, %v1242
    %v1499 = vadd.f32 %v602, %v1243
    %v1500 = vadd.f32 %v603, %v1244
    %v1501 = vadd.f32 %v604, %v1245
    %v1502 = vadd.f32 %v605, %v1246
    %v1503 = vadd.f32 %v606, %v1247
    %v1504 = vadd.f32 %v607, %v1248
    %v1505 = vadd.f32 %v608, %v1249
    %v1506 = vadd.f32 %v609, %v1250
    %v1507 = vadd.f32 %v610, %v1251
    %v1508 = vadd.f32 %v611, %v1252
    %v1509 = vadd.f32 %v612, %v1253
    %v1510 = vadd.f32 %v613, %v1254
    %v1511 = vadd.f32 %v614, %v1255
    %v1512 = vadd.f32 %v615, %v1256
    %v1513 = vadd.f32 %v616, %v1257
    %v1514 = vadd.f32 %v617, %v1258
    %v1515 = vadd.f32 %v618, %v1259
    %v1516 = vadd.f32 %v619, %v1260
    %v1517 = vadd.f32 %v620, %v1261
    %v1518 = vadd.f32 %v621, %v1262
    %v1519 = vadd.f32 %v622, %v1263
    %v1520 = vadd.f32 %v623, %v1264
    %v1521 = vadd.f32 %v624, %v1265
    %v1522 = vadd.f32 %v625, %v1266
    %v1523 = vadd.f32 %v626, %v1267
    %v1524 = vadd.f32 %v627, %v1268
    %v1525 = vadd.f32 %v628, %v1269
    %v1526 = vadd.f32 %v629, %v1270
    %v1527 = vadd.f32 %v630, %v1271
    %v1528 = vadd.f32 %v631, %v1272
    %v1529 = vadd.f32 %v632, %v1273
    %v1530 = vadd.f32 %v633, %v1274
    %v1531 = vadd.f32 %v634, %v1275
    %v1532 = vadd.f32 %v635, %v1276
    %v1533 = vadd.f32 %v636, %v1277
    %v1534 = vadd.f32 %v637, %v1278
    %v1535 = vadd.f32 %v638, %v1279
    %v1536 = vadd.f32 %v639, %v1280
    %v1537 = vadd.f32 %v640, %v1281
    %v1538 = vadd.f32 %v641, %v1282
    %v1539 = vadd.f32 %v642, %v1283
    %v1540 = vadd.f32 %v643, %v1284
    %v1541 = vadd.f32 %v644, %v1285
    %v1542 = vadd.f32 %v645, %v1286
    %v1543 = vadd.f32 %v646, %v1287
    %v1544 = vadd.f32 %v647, %v1288
    %v1545 = vadd.f32 %v648, %v1289
    %v1546 = vadd.f32 %v649, %v1290
    %v1547 = vadd.f32 %v650, %v1291
    %v1548 = vadd.f32 %v651, %v1292
    %v1549 = vadd.f32 %v652, %v1293
    %v1550 = vadd.f32 %v653, %v1294
    %v1551 = vadd.f32 %v654, %v1295
    %v1552 = vadd.f32 %v655, %v1296
    %v1553 = vadd.f32 %v656, %v1297
    %v1554 = vadd.f32 %v657, %v1298
    %v1555 = vadd.f32 %v658, %v1299
    %v1556 = vadd.f32 %v659, %v1300
    %v1557 = vadd.f32 %v660, %v1301
    %v1558 = vadd.f32 %v661, %v1302
    %v1559 = vadd.f32 %v662, %v1303
    %v1560 = vadd.f32 %v663, %v1304
    %v1561 = vadd.f32 %v664, %v1305
    %v1562 = vadd.f32 %v665, %v1306
    %v1563 = vadd.f32 %v666, %v1307
    %v1564 = vadd.f32 %v667, %v1308
    %v1565 = vadd.f32 %v668, %v1309
    %v1566 = vadd.f32 %v669, %v1310
    %v1567 = vadd.f32 %v670, %v1311
    %v1568 = vadd.f32 %v671, %v1312
    %v1569 = vadd.f32 %v672, %v1313
    %v1570 = vadd.f32 %v673, %v1314
    %v1571 = vadd.f32 %v674, %v1315
    %v1572 = vadd.f32 %v675, %v1316
    %v1573 = vadd.f32 %v676, %v1317
    %v1574 = vadd.f32 %v677, %v1318
    %v1575 = vadd.f32 %v678, %v1319
    %v1576 = vadd.f32 %v679, %v1320
    %v1577 = vadd.f32 %v680, %v1321
    %v1578 = vadd.f32 %v681, %v1322
    %v1579 = vadd.f32 %v682, %v1323
    %v1580 = vadd.f32 %v683, %v1324
    %v1581 = vadd.f32 %v684, %v1325
    %v1582 = vadd.f32 %v685, %v1326
    %v1583 = vadd.f32 %v686, %v1327
    %v1584 = vadd.f32 %v687, %v1328
    %v1585 = vadd.f32 %v688, %v1329
    %v1586 = vadd.f32 %v689, %v1330
    %v1587 = vadd.f32 %v690, %v1331
    %v1588 = vadd.f32 %v691, %v1332
    %v1589 = vadd.f32 %v692, %v1333
    %v1590 = vadd.f32 %v693, %v1334
    %v1591 = vadd.f32 %v694, %v1335
    %v1592 = vadd.f32 %v695, %v1336
    %v1593 = vadd.f32 %v696, %v1337
    %v1594 = vadd.f32 %v697, %v1338
    %v1595 = vadd.f32 %v698, %v1339
    %v1596 = vadd.f32 %v699, %v1340
    %v1597 = vadd.f32 %v700, %v1341
    %v1598 = vadd.f32 %v701, %v1342
    %v1599 = vpack.c.bf16 %v1347, %v1343
    %v1600 = vpack.c.bf16 %v1348, %v1344
    %v1601 = vpack.c.bf16 %v1349, %v1345
    %v1602 = vpack.c.bf16 %v1350, %v1346
    %v1603 = vpack.c.bf16 %v1355, %v1351
    %v1604 = vpack.c.bf16 %v1356, %v1352
    %v1605 = vpack.c.bf16 %v1357, %v1353
    %v1606 = vpack.c.bf16 %v1358, %v1354
    %v1607 = vpack.c.bf16 %v1363, %v1359
    %v1608 = vpack.c.bf16 %v1364, %v1360
    %v1609 = vpack.c.bf16 %v1365, %v1361
    %v1610 = vpack.c.bf16 %v1366, %v1362
    %v1611 = vpack.c.bf16 %v1371, %v1367
    %v1612 = vpack.c.bf16 %v1372, %v1368
    %v1613 = vpack.c.bf16 %v1373, %v1369
    %v1614 = vpack.c.bf16 %v1374, %v1370
    %v1615 = vpack.c.bf16 %v1379, %v1375
    %v1616 = vpack.c.bf16 %v1380, %v1376
    %v1617 = vpack.c.bf16 %v1381, %v1377
    %v1618 = vpack.c.bf16 %v1382, %v1378
    %v1619 = vpack.c.bf16 %v1387, %v1383
    %v1620 = vpack.c.bf16 %v1388, %v1384
    %v1621 = vpack.c.bf16 %v1389, %v1385
    %v1622 = vpack.c.bf16 %v1390, %v1386
    %v1623 = vpack.c.bf16 %v1395, %v1391
    %v1624 = vpack.c.bf16 %v1396, %v1392
    %v1625 = vpack.c.bf16 %v1397, %v1393
    %v1626 = vpack.c.bf16 %v1398, %v1394
    %v1627 = vpack.c.bf16 %v1403, %v1399
    %v1628 = vpack.c.bf16 %v1404, %v1400
    %v1629 = vpack.c.bf16 %v1405, %v1401
    %v1630 = vpack.c.bf16 %v1406, %v1402
    %v1631 = vpack.c.bf16 %v1411, %v1407
    %v1632 = vpack.c.bf16 %v1412, %v1408
    %v1633 = vpack.c.bf16 %v1413, %v1409
    %v1634 = vpack.c.bf16 %v1414, %v1410
    %v1635 = vpack.c.bf16 %v1419, %v1415
    %v1636 = vpack.c.bf16 %v1420, %v1416
    %v1637 = vpack.c.bf16 %v1421, %v1417
    %v1638 = vpack.c.bf16 %v1422, %v1418
    %v1639 = vpack.c.bf16 %v1427, %v1423
    %v1640 = vpack.c.bf16 %v1428, %v1424
    %v1641 = vpack.c.bf16 %v1429, %v1425
    %v1642 = vpack.c.bf16 %v1430, %v1426
    %v1643 = vpack.c.bf16 %v1435, %v1431
    %v1644 = vpack.c.bf16 %v1436, %v1432
    %v1645 = vpack.c.bf16 %v1437, %v1433
    %v1646 = vpack.c.bf16 %v1438, %v1434
    %v1647 = vpack.c.bf16 %v1443, %v1439
    %v1648 = vpack.c.bf16 %v1444, %v1440
    %v1649 = vpack.c.bf16 %v1445, %v1441
    %v1650 = vpack.c.bf16 %v1446, %v1442
    %v1651 = vpack.c.bf16 %v1451, %v1447
    %v1652 = vpack.c.bf16 %v1452, %v1448
    %v1653 = vpack.c.bf16 %v1453, %v1449
    %v1654 = vpack.c.bf16 %v1454, %v1450
    %v1655 = vpack.c.bf16 %v1459, %v1455
    %v1656 = vpack.c.bf16 %v1460, %v1456
    %v1657 = vpack.c.bf16 %v1461, %v1457
    %v1658 = vpack.c.bf16 %v1462, %v1458
    %v1659 = vpack.c.bf16 %v1467, %v1463
    %v1660 = vpack.c.bf16 %v1468, %v1464
    %v1661 = vpack.c.bf16 %v1469, %v1465
    %v1662 = vpack.c.bf16 %v1470, %v1466
    %v1663 = vpack.c.bf16 %v1475, %v1471
    %v1664 = vpack.c.bf16 %v1476, %v1472
    %v1665 = vpack.c.bf16 %v1477, %v1473
    %v1666 = vpack.c.bf16 %v1478, %v1474
    %v1667 = vpack.c.bf16 %v1483, %v1479
    %v1668 = vpack.c.bf16 %v1484, %v1480
    %v1669 = vpack.c.bf16 %v1485, %v1481
    %v1670 = vpack.c.bf16 %v1486, %v1482
    %v1671 = vpack.c.bf16 %v1491, %v1487
    %v1672 = vpack.c.bf16 %v1492, %v1488
    %v1673 = vpack.c.bf16 %v1493, %v1489
    %v1674 = vpack.c.bf16 %v1494, %v1490
    %v1675 = vpack.c.bf16 %v1499, %v1495
    %v1676 = vpack.c.bf16 %v1500, %v1496
    %v1677 = vpack.c.bf16 %v1501, %v1497
    %v1678 = vpack.c.bf16 %v1502, %v1498
    %v1679 = vpack.c.bf16 %v1507, %v1503
    %v1680 = vpack.c.bf16 %v1508, %v1504
    %v1681 = vpack.c.bf16 %v1509, %v1505
    %v1682 = vpack.c.bf16 %v1510, %v1506
    %v1683 = vpack.c.bf16 %v1515, %v1511
    %v1684 = vpack.c.bf16 %v1516, %v1512
    %v1685 = vpack.c.bf16 %v1517, %v1513
    %v1686 = vpack.c.bf16 %v1518, %v1514
    %v1687 = vpack.c.bf16 %v1523, %v1519
    %v1688 = vpack.c.bf16 %v1524, %v1520
    %v1689 = vpack.c.bf16 %v1525, %v1521
    %v1690 = vpack.c.bf16 %v1526, %v1522
    %v1691 = vpack.c.bf16 %v1531, %v1527
    %v1692 = vpack.c.bf16 %v1532, %v1528
    %v1693 = vpack.c.bf16 %v1533, %v1529
    %v1694 = vpack.c.bf16 %v1534, %v1530
    %v1695 = vpack.c.bf16 %v1539, %v1535
    %v1696 = vpack.c.bf16 %v1540, %v1536
    %v1697 = vpack.c.bf16 %v1541, %v1537
    %v1698 = vpack.c.bf16 %v1542, %v1538
    %v1699 = vpack.c.bf16 %v1547, %v1543
    %v1700 = vpack.c.bf16 %v1548, %v1544
    %v1701 = vpack.c.bf16 %v1549, %v1545
    %v1702 = vpack.c.bf16 %v1550, %v1546
    %v1703 = vpack.c.bf16 %v1555, %v1551
    %v1704 = vpack.c.bf16 %v1556, %v1552
    %v1705 = vpack.c.bf16 %v1557, %v1553
    %v1706 = vpack.c.bf16 %v1558, %v1554
    %v1707 = vpack.c.bf16 %v1563, %v1559
    %v1708 = vpack.c.bf16 %v1564, %v1560
    %v1709 = vpack.c.bf16 %v1565, %v1561
    %v1710 = vpack.c.bf16 %v1566, %v1562
    %v1711 = vpack.c.bf16 %v1571, %v1567
    %v1712 = vpack.c.bf16 %v1572, %v1568
    %v1713 = vpack.c.bf16 %v1573, %v1569
    %v1714 = vpack.c.bf16 %v1574, %v1570
    %v1715 = vpack.c.bf16 %v1579, %v1575
    %v1716 = vpack.c.bf16 %v1580, %v1576
    %v1717 = vpack.c.bf16 %v1581, %v1577
    %v1718 = vpack.c.bf16 %v1582, %v1578
    %v1719 = vpack.c.bf16 %v1587, %v1583
    %v1720 = vpack.c.bf16 %v1588, %v1584
    %v1721 = vpack.c.bf16 %v1589, %v1585
    %v1722 = vpack.c.bf16 %v1590, %v1586
    %v1723 = vpack.c.bf16 %v1595, %v1591
    %v1724 = vpack.c.bf16 %v1596, %v1592
    %v1725 = vpack.c.bf16 %v1597, %v1593
    %v1726 = vpack.c.bf16 %v1598, %v1594
    %v1727 = vld [vmem:[#allocation12] sm:$0xf]
    %v1728 = vld [vmem:[%s9] sm:$0xf]
    %v1729 = vstv %s194
    %v1730 = vmul.f32 %v1729, %v1728
    %v1731 = vadd.f32 %v1727, %v1730
    %v1732 = vpack.c.bf16 %v314, %v314
    %v1733 = vpack.c.bf16 %v315, %v315
    %v1734 = vpack.c.bf16 %v316, %v316
    %v1735 = vpack.c.bf16 %v317, %v317
    %v1737 = vperm.slane %v1731, 0
    %v1738 = vperm.slane %v1731, 1
    %v1739 = vperm.slane %v1731, 2
    %v1740 = vperm.slane %v1731, 3
    %1745 = vmatpush.bf16.msra.mxu0 %v1627
    %1746 = vmatpush.bf16.msra.mxu0 %v1623
    %1747 = vmatpush.bf16.msra.mxu0 %v1619
    %1748 = vmatpush.bf16.msra.mxu0 %v1615
    %1749 = vmatpush.bf16.msra.mxu0 %v1611
    %1750 = vmatpush.bf16.msra.mxu0 %v1607
    %1751 = vmatpush.bf16.msra.mxu0 %v1603
    %1752 = vmatpush.bf16.msra.mxu0 %v1599
    %1753 = vmatmul.bf16.gmra.mxu0 %v1732
    %v1754 = vpop.f32.mrf.mxu0
    %v1755 = vadd.f32 %v1737, %v1754
    %v1756 = vpop.f32.mrf.mxu0
    %1757 = vdwg.mxu0
    %1758 = vmatpush.bf16.msra.mxu0 %v1659
    %1759 = vmatpush.bf16.msra.mxu0 %v1655
    %1760 = vmatpush.bf16.msra.mxu0 %v1651
    %1761 = vmatpush.bf16.msra.mxu0 %v1647
    %1762 = vmatpush.bf16.msra.mxu0 %v1643
    %1763 = vmatpush.bf16.msra.mxu0 %v1639
    %1764 = vmatpush.bf16.msra.mxu0 %v1635
    %1765 = vmatpush.bf16.msra.mxu0 %v1631
    %1766 = vmatmul.bf16.gmra.mxu0 %v1733
    %v1767 = vpop.f32.mrf.mxu0
    %v1768 = vadd.f32 %v1755, %v1767
    %v1769 = vpop.f32.mrf.mxu0
    %1770 = vdwg.mxu0
    %1771 = vmatpush.bf16.msra.mxu0 %v1691
    %1772 = vmatpush.bf16.msra.mxu0 %v1687
    %1773 = vmatpush.bf16.msra.mxu0 %v1683
    %1774 = vmatpush.bf16.msra.mxu0 %v1679
    %1775 = vmatpush.bf16.msra.mxu0 %v1675
    %1776 = vmatpush.bf16.msra.mxu0 %v1671
    %1777 = vmatpush.bf16.msra.mxu0 %v1667
    %1778 = vmatpush.bf16.msra.mxu0 %v1663
    %1779 = vmatmul.bf16.gmra.mxu0 %v1734
    %v1780 = vpop.f32.mrf.mxu0
    %v1781 = vadd.f32 %v1768, %v1780
    %v1782 = vpop.f32.mrf.mxu0
    %1783 = vdwg.mxu0
    %1784 = vmatpush.bf16.msra.mxu0 %v1723
    %1785 = vmatpush.bf16.msra.mxu0 %v1719
    %1786 = vmatpush.bf16.msra.mxu0 %v1715
    %1787 = vmatpush.bf16.msra.mxu0 %v1711
    %1788 = vmatpush.bf16.msra.mxu0 %v1707
    %1789 = vmatpush.bf16.msra.mxu0 %v1703
    %1790 = vmatpush.bf16.msra.mxu0 %v1699
    %1791 = vmatpush.bf16.msra.mxu0 %v1695
    %1792 = vmatmul.bf16.gmra.mxu0 %v1735
    %v1793 = vpop.f32.mrf.mxu0
    %v1794 = vadd.f32 %v1781, %v1793
    %v1795 = vpop.f32.mrf.mxu0
    %1796 = vdwg.mxu0
    %1797 = vmatpush.bf16.msra.mxu0 %v1628
    %1798 = vmatpush.bf16.msra.mxu0 %v1624
    %1799 = vmatpush.bf16.msra.mxu0 %v1620
    %1800 = vmatpush.bf16.msra.mxu0 %v1616
    %1801 = vmatpush.bf16.msra.mxu0 %v1612
    %1802 = vmatpush.bf16.msra.mxu0 %v1608
    %1803 = vmatpush.bf16.msra.mxu0 %v1604
    %1804 = vmatpush.bf16.msra.mxu0 %v1600
    %1805 = vmatmul.bf16.gmra.mxu0 %v1732
    %v1806 = vpop.f32.mrf.mxu0
    %v1807 = vadd.f32 %v1738, %v1806
    %v1808 = vpop.f32.mrf.mxu0
    %1809 = vdwg.mxu0
    %1810 = vmatpush.bf16.msra.mxu0 %v1660
    %1811 = vmatpush.bf16.msra.mxu0 %v1656
    %1812 = vmatpush.bf16.msra.mxu0 %v1652
    %1813 = vmatpush.bf16.msra.mxu0 %v1648
    %1814 = vmatpush.bf16.msra.mxu0 %v1644
    %1815 = vmatpush.bf16.msra.mxu0 %v1640
    %1816 = vmatpush.bf16.msra.mxu0 %v1636
    %1817 = vmatpush.bf16.msra.mxu0 %v1632
    %1818 = vmatmul.bf16.gmra.mxu0 %v1733
    %v1819 = vpop.f32.mrf.mxu0
    %v1820 = vadd.f32 %v1807, %v1819
    %v1821 = vpop.f32.mrf.mxu0
    %1822 = vdwg.mxu0
    %1823 = vmatpush.bf16.msra.mxu0 %v1692
    %1824 = vmatpush.bf16.msra.mxu0 %v1688
    %1825 = vmatpush.bf16.msra.mxu0 %v1684
    %1826 = vmatpush.bf16.msra.mxu0 %v1680
    %1827 = vmatpush.bf16.msra.mxu0 %v1676
    %1828 = vmatpush.bf16.msra.mxu0 %v1672
    %1829 = vmatpush.bf16.msra.mxu0 %v1668
    %1830 = vmatpush.bf16.msra.mxu0 %v1664
    %1831 = vmatmul.bf16.gmra.mxu0 %v1734
    %v1832 = vpop.f32.mrf.mxu0
    %v1833 = vadd.f32 %v1820, %v1832
    %v1834 = vpop.f32.mrf.mxu0
    %1835 = vdwg.mxu0
    %1836 = vmatpush.bf16.msra.mxu0 %v1724
    %1837 = vmatpush.bf16.msra.mxu0 %v1720
    %1838 = vmatpush.bf16.msra.mxu0 %v1716
    %1839 = vmatpush.bf16.msra.mxu0 %v1712
    %1840 = vmatpush.bf16.msra.mxu0 %v1708
    %1841 = vmatpush.bf16.msra.mxu0 %v1704
    %1842 = vmatpush.bf16.msra.mxu0 %v1700
    %1843 = vmatpush.bf16.msra.mxu0 %v1696
    %1844 = vmatmul.bf16.gmra.mxu0 %v1735
    %v1845 = vpop.f32.mrf.mxu0
    %v1846 = vadd.f32 %v1833, %v1845
    %v1847 = vpop.f32.mrf.mxu0
    %1848 = vdwg.mxu0
    %1849 = vmatpush.bf16.msra.mxu0 %v1629
    %1850 = vmatpush.bf16.msra.mxu0 %v1625
    %1851 = vmatpush.bf16.msra.mxu0 %v1621
    %1852 = vmatpush.bf16.msra.mxu0 %v1617
    %1853 = vmatpush.bf16.msra.mxu0 %v1613
    %1854 = vmatpush.bf16.msra.mxu0 %v1609
    %1855 = vmatpush.bf16.msra.mxu0 %v1605
    %1856 = vmatpush.bf16.msra.mxu0 %v1601
    %1857 = vmatmul.bf16.gmra.mxu0 %v1732
    %v1858 = vpop.f32.mrf.mxu0
    %v1859 = vadd.f32 %v1739, %v1858
    %v1860 = vpop.f32.mrf.mxu0
    %1861 = vdwg.mxu0
    %1862 = vmatpush.bf16.msra.mxu0 %v1661
    %1863 = vmatpush.bf16.msra.mxu0 %v1657
    %1864 = vmatpush.bf16.msra.mxu0 %v1653
    %1865 = vmatpush.bf16.msra.mxu0 %v1649
    %1866 = vmatpush.bf16.msra.mxu0 %v1645
    %1867 = vmatpush.bf16.msra.mxu0 %v1641
    %1868 = vmatpush.bf16.msra.mxu0 %v1637
    %1869 = vmatpush.bf16.msra.mxu0 %v1633
    %1870 = vmatmul.bf16.gmra.mxu0 %v1733
    %v1871 = vpop.f32.mrf.mxu0
    %v1872 = vadd.f32 %v1859, %v1871
    %v1873 = vpop.f32.mrf.mxu0
    %1874 = vdwg.mxu0
    %1875 = vmatpush.bf16.msra.mxu0 %v1693
    %1876 = vmatpush.bf16.msra.mxu0 %v1689
    %1877 = vmatpush.bf16.msra.mxu0 %v1685
    %1878 = vmatpush.bf16.msra.mxu0 %v1681
    %1879 = vmatpush.bf16.msra.mxu0 %v1677
    %1880 = vmatpush.bf16.msra.mxu0 %v1673
    %1881 = vmatpush.bf16.msra.mxu0 %v1669
    %1882 = vmatpush.bf16.msra.mxu0 %v1665
    %1883 = vmatmul.bf16.gmra.mxu0 %v1734
    %v1884 = vpop.f32.mrf.mxu0
    %v1885 = vadd.f32 %v1872, %v1884
    %v1886 = vpop.f32.mrf.mxu0
    %1887 = vdwg.mxu0
    %1888 = vmatpush.bf16.msra.mxu0 %v1725
    %1889 = vmatpush.bf16.msra.mxu0 %v1721
    %1890 = vmatpush.bf16.msra.mxu0 %v1717
    %1891 = vmatpush.bf16.msra.mxu0 %v1713
    %1892 = vmatpush.bf16.msra.mxu0 %v1709
    %1893 = vmatpush.bf16.msra.mxu0 %v1705
    %1894 = vmatpush.bf16.msra.mxu0 %v1701
    %1895 = vmatpush.bf16.msra.mxu0 %v1697
    %1896 = vmatmul.bf16.gmra.mxu0 %v1735
    %v1897 = vpop.f32.mrf.mxu0
    %v1898 = vadd.f32 %v1885, %v1897
    %v1899 = vpop.f32.mrf.mxu0
    %1900 = vdwg.mxu0
    %1901 = vmatpush.bf16.msra.mxu0 %v1630
    %1902 = vmatpush.bf16.msra.mxu0 %v1626
    %1903 = vmatpush.bf16.msra.mxu0 %v1622
    %1904 = vmatpush.bf16.msra.mxu0 %v1618
    %1905 = vmatpush.bf16.msra.mxu0 %v1614
    %1906 = vmatpush.bf16.msra.mxu0 %v1610
    %1907 = vmatpush.bf16.msra.mxu0 %v1606
    %1908 = vmatpush.bf16.msra.mxu0 %v1602
    %1909 = vmatmul.bf16.gmra.mxu0 %v1732
    %v1910 = vpop.f32.mrf.mxu0
    %v1911 = vadd.f32 %v1740, %v1910
    %v1912 = vpop.f32.mrf.mxu0
    %1913 = vdwg.mxu0
    %1914 = vmatpush.bf16.msra.mxu0 %v1662
    %1915 = vmatpush.bf16.msra.mxu0 %v1658
    %1916 = vmatpush.bf16.msra.mxu0 %v1654
    %1917 = vmatpush.bf16.msra.mxu0 %v1650
    %1918 = vmatpush.bf16.msra.mxu0 %v1646
    %1919 = vmatpush.bf16.msra.mxu0 %v1642
    %1920 = vmatpush.bf16.msra.mxu0 %v1638
    %1921 = vmatpush.bf16.msra.mxu0 %v1634
    %1922 = vmatmul.bf16.gmra.mxu0 %v1733
    %v1923 = vpop.f32.mrf.mxu0
    %v1924 = vadd.f32 %v1911, %v1923
    %v1925 = vpop.f32.mrf.mxu0
    %1926 = vdwg.mxu0
    %1927 = vmatpush.bf16.msra.mxu0 %v1694
    %1928 = vmatpush.bf16.msra.mxu0 %v1690
    %1929 = vmatpush.bf16.msra.mxu0 %v1686
    %1930 = vmatpush.bf16.msra.mxu0 %v1682
    %1931 = vmatpush.bf16.msra.mxu0 %v1678
    %1932 = vmatpush.bf16.msra.mxu0 %v1674
    %1933 = vmatpush.bf16.msra.mxu0 %v1670
    %1934 = vmatpush.bf16.msra.mxu0 %v1666
    %1935 = vmatmul.bf16.gmra.mxu0 %v1734
    %v1936 = vpop.f32.mrf.mxu0
    %v1937 = vadd.f32 %v1924, %v1936
    %v1938 = vpop.f32.mrf.mxu0
    %1939 = vdwg.mxu0
    %1940 = vmatpush.bf16.msra.mxu0 %v1726
    %1941 = vmatpush.bf16.msra.mxu0 %v1722
    %1942 = vmatpush.bf16.msra.mxu0 %v1718
    %1943 = vmatpush.bf16.msra.mxu0 %v1714
    %1944 = vmatpush.bf16.msra.mxu0 %v1710
    %1945 = vmatpush.bf16.msra.mxu0 %v1706
    %1946 = vmatpush.bf16.msra.mxu0 %v1702
    %1947 = vmatpush.bf16.msra.mxu0 %v1698
    %1948 = vmatmul.bf16.gmra.mxu0 %v1735
    %v1949 = vpop.f32.mrf.mxu0
    %v1950 = vadd.f32 %v1937, %v1949
    %v1951 = vpop.f32.mrf.mxu0
    %1952 = vdwg.mxu0
    %v1953 = vmax.f32 %v1794, 0.0
    %v1954 = vmax.f32 %v1846, 0.0
    %v1955 = vmax.f32 %v1898, 0.0
    %v1956 = vmax.f32 %v1950, 0.0
    %v1957 = vld [vmem:[#allocation15] sm:$0xf]
    %v1958 = vunpack.c.l.bf16 %v1957
    %v1959 = vld [vmem:[#allocation17] sm:$0xf]
    %v1960 = vunpack.c.l.bf16 %v1959
    %v1961 = vstv %s195
    %v1962 = vmul.f32 %v1961, %v1960
    %v1963 = vadd.f32 %v1958, %v1962
    %1965 = vst [vmem:[#allocation1] ss:$4 sm:$0xff] %v1963
    %v1966 = vld.sshfl [vmem:[#allocation1] sm:$0xff pattern:$0x73625140]
    %v1967 = vld.sshfl [vmem:[#allocation1 + $0x8] sm:$0xff pattern:$0x73625140]
    %v1968 = vld.sshfl [vmem:[#allocation1 + $0x10] sm:$0xff pattern:$0x73625140]
    %v1969 = vld.sshfl [vmem:[#allocation1 + $0x18] sm:$0xff pattern:$0x73625140]
    %v1974 = vpack.c.bf16 %v1966, %v1966
    %v1975 = vpack.c.bf16 %v1967, %v1967
    %v1976 = vpack.c.bf16 %v1968, %v1968
    %v1977 = vpack.c.bf16 %v1969, %v1969
    %v1978 = vld [vmem:[%s11] sm:$0x1]
    %v1979 = vld [vmem:[%s13] sm:$0x1]
    %v1980 = vstv %s196
    %v1981 = vmul.f32 %v1980, %v1979
    %v1982 = vadd.f32 %v1978, %v1981
    %v1983 = vpack.c.bf16 %v1953, %v1953
    %v1984 = vpack.c.bf16 %v1954, %v1954
    %v1985 = vpack.c.bf16 %v1955, %v1955
    %v1986 = vpack.c.bf16 %v1956, %v1956
    %v1988 = vperm.slane %v1982, 0
    %1990 = vmatpush.bf16.xpose.msra.mxu0 0
    %1991 = vmatpush.bf16.xpose.msra.mxu0 0
    %1992 = vmatpush.bf16.xpose.msra.mxu0 0
    %1993 = vmatpush.bf16.xpose.msra.mxu0 0
    %1994 = vmatpush.bf16.xpose.msra.mxu0 0
    %1995 = vmatpush.bf16.xpose.msra.mxu0 0
    %1996 = vmatpush.bf16.xpose.msra.mxu0 0
    %1997 = vmatpush.bf16.xpose.msra.mxu0 %v1974
    %1998 = vmatmul.bf16.gmra.mxu0 %v1983
    %v1999 = vpop.f32.mrf.mxu0
    %v2000 = vadd.f32 %v1988, %v1999
    %v2001 = vpop.f32.mrf.mxu0
    %2002 = vdwg.mxu0
    %2003 = vmatpush.bf16.xpose.msra.mxu0 0
    %2004 = vmatpush.bf16.xpose.msra.mxu0 0
    %2005 = vmatpush.bf16.xpose.msra.mxu0 0
    %2006 = vmatpush.bf16.xpose.msra.mxu0 0
    %2007 = vmatpush.bf16.xpose.msra.mxu0 0
    %2008 = vmatpush.bf16.xpose.msra.mxu0 0
    %2009 = vmatpush.bf16.xpose.msra.mxu0 0
    %2010 = vmatpush.bf16.xpose.msra.mxu0 %v1975
    %2011 = vmatmul.bf16.gmra.mxu0 %v1984
    %v2012 = vpop.f32.mrf.mxu0
    %v2013 = vadd.f32 %v2000, %v2012
    %v2014 = vpop.f32.mrf.mxu0
    %2015 = vdwg.mxu0
    %2016 = vmatpush.bf16.xpose.msra.mxu0 0
    %2017 = vmatpush.bf16.xpose.msra.mxu0 0
    %2018 = vmatpush.bf16.xpose.msra.mxu0 0
    %2019 = vmatpush.bf16.xpose.msra.mxu0 0
    %2020 = vmatpush.bf16.xpose.msra.mxu0 0
    %2021 = vmatpush.bf16.xpose.msra.mxu0 0
    %2022 = vmatpush.bf16.xpose.msra.mxu0 0
    %2023 = vmatpush.bf16.xpose.msra.mxu0 %v1976
    %2024 = vmatmul.bf16.gmra.mxu0 %v1985
    %v2025 = vpop.f32.mrf.mxu0
    %v2026 = vadd.f32 %v2013, %v2025
    %v2027 = vpop.f32.mrf.mxu0
    %2028 = vdwg.mxu0
    %2029 = vmatpush.bf16.xpose.msra.mxu0 0
    %2030 = vmatpush.bf16.xpose.msra.mxu0 0
    %2031 = vmatpush.bf16.xpose.msra.mxu0 0
    %2032 = vmatpush.bf16.xpose.msra.mxu0 0
    %2033 = vmatpush.bf16.xpose.msra.mxu0 0
    %2034 = vmatpush.bf16.xpose.msra.mxu0 0
    %2035 = vmatpush.bf16.xpose.msra.mxu0 0
    %2036 = vmatpush.bf16.xpose.msra.mxu0 %v1977
    %2037 = vmatmul.bf16.gmra.mxu0 %v1986
    %v2038 = vpop.f32.mrf.mxu0
    %v2039 = vadd.f32 %v2026, %v2038
    %v2040 = vpop.f32.mrf.mxu0
    %2041 = vdwg.mxu0
    %v2042 = vlaneseq
    %v2043 = vand.u32 %v2042, 127
    %v2044 = vxor.u32 %v2039, 2147483648
    %v2045 = vmul.f32 %v2044, 1.442695
    %v2046 = vpow.pop %v2045
    %v2047 = vadd.f32 %v2046, 1.0
    %v2048 = vrcp.pop %v2047
    %v2049 = vmul.f32 %v2047, %v2048
    %v2050 = vsub.f32 1.0, %v2049
    %v2051 = vmul.f32 %v2048, %v2050
    %v2052 = vadd.f32 %v2048, %v2051
    %vm2053 = vweird.f32 %v2047
    %vm2054 = vweird.f32 %v2048
    %vm2055 = vmor %vm2053, %vm2054
    %v2056 = vsel %vm2055, %v2048, %v2052
    %v2057 = vand.u32 2147483647, %v2047
    %vm2058 = vcmp.eq.f32.partialorder %v2057, 8.507059e+37
    %v2059 = vand.u32 %v2047, 2147483648
    %v2060 = vor.u32 1.1754944e-38, %v2059
    %v2061 = vsel %vm2058, %v2060, %v2056
    %v2062 = vmul.f32 1.0, %v2061
    %v2063 = vmul.f32 %v2062, 0.22
    %v2064 = vtanh.pop %v2039
    %v2065 = vmul.f32 %v2064, 2.0
    %vm2066 = vcmp.eq.s32.totalorder %v2043, 0
    %vm2067 = vcmp.eq.s32.totalorder %v2043, 1
    %v2068 = vsel %vm2067, %v2065, %v2039
    %v2069 = vsel %vm2066, %v2063, %v2068
    %vm2070 = vcmask 15360
    %2071 = vst.msk [vmem:[%s14] sm:$0xff] %vm2070, %v2069
    // Predicated region
    $region98: #{tpu_custom_call.1} parent=1 // pred_check
      _
    $region99: #{tpu_custom_call.1} parent=1 // pred_check_branch
      %2073 = sbr.rel (0) target = $region101
    $region100: #{tpu_custom_call.1} parent=1 // pred_region
      _
    $region101: #{tpu_custom_call.1} parent=1 // pred_fallthru
      _
    // Predicated region
    $region102: #{tpu_custom_call.1} parent=1 // pred_check
      _
    $region103: #{tpu_custom_call.1} parent=1 // pred_check_branch
      %2075 = sbr.rel (0) target = $region105
    $region104: #{tpu_custom_call.1} parent=1 // pred_region
      _
    $region105: #{tpu_custom_call.1} parent=1 // pred_fallthru
      _
    %2076 = vsyncpa [#allocation3], 1
    %2077 = vsyncpa [#allocation7], 1
    %2078 = vsyncpa [#allocation10], 1
    %2079 = vsyncpa [#allocation13], 1
    %2080 = vsyncpa [#allocation16], 1
    %2081 = vsyncpa [#allocation4], 1

</llo_original>
